<compile_context>
chip_gen: v5e
topology: v5e:2x2
jax: 0.10.0
libtpu: 0.0.40
codegen_flags: <defaults>
</compile_context>

<pallas_src>
import functools
import math

import jax
import jax.numpy as jnp
from jax.experimental import pallas as pl
from jax.experimental.pallas import tpu as pltpu


# ---------------------------------------------------------------------------
# Kernel
# ---------------------------------------------------------------------------
def _attn_kernel(*refs, gsz, hd, heads_per_group, scale, tq, cross):
    """One grid step = (batch b, head-group g, query-tile qt).

    refs (self):  x, mask, wqkv, bqkv, out, vk_scratch
    refs (cross): x_qv(=encoder_y), x_k(=hidden_states), mask, wqkv, bqkv,
                  out, vk_scratch
    wqkv columns per group are laid out [Q | V | K], each gsz wide.
    vk_scratch columns are laid out    [V | K],     each gsz wide.
    """
    f32 = jnp.float32
    if cross:
        xqv_ref, xk_ref, mask_ref, w_ref, b_ref, o_ref, vk_sc = refs
    else:
        x_ref, mask_ref, w_ref, b_ref, o_ref, vk_sc = refs
        xqv_ref = x_ref
        xk_ref = x_ref

    g = pl.program_id(1)    # head group
    qt = pl.program_id(2)   # query tile

    # ---- phase 1: project K and V for the FULL sequence, once per (b, g) ----
    @pl.when(qt == 0)
    def _():
        if cross:
            v = (jnp.dot(xqv_ref[0], w_ref[g, :, pl.ds(gsz, gsz)],
                         preferred_element_type=f32)
                 + b_ref[g, :, pl.ds(gsz, gsz)].astype(f32))
            k = (jnp.dot(xk_ref[0], w_ref[g, :, pl.ds(2 * gsz, gsz)],
                         preferred_element_type=f32)
                 + b_ref[g, :, pl.ds(2 * gsz, gsz)].astype(f32))
            vk_sc[:, pl.ds(0, gsz)] = v.astype(vk_sc.dtype)
            vk_sc[:, pl.ds(gsz, gsz)] = k.astype(vk_sc.dtype)
        else:
            # single fused matmul produces V and K (adjacent weight columns)
            vk = (jnp.dot(x_ref[0], w_ref[g, :, pl.ds(gsz, 2 * gsz)],
                          preferred_element_type=f32)
                  + b_ref[g, :, pl.ds(gsz, 2 * gsz)].astype(f32))
            vk_sc[...] = vk.astype(vk_sc.dtype)

    # ---- phase 2: this query tile ----
    row0 = pl.multiple_of(qt * tq, tq)
    xq = xqv_ref[0, pl.ds(row0, tq), :]                               # (tq, H)
    # 1/sqrt(hd) folded into the small (tq, gsz) Q tile, not the (tq, L) scores.
    q = (jnp.dot(xq, w_ref[g, :, pl.ds(0, gsz)], preferred_element_type=f32)
         + b_ref[g, :, pl.ds(0, gsz)].astype(f32)) * scale            # f32
    q = q.astype(xq.dtype)                       # native MXU dtype for Q @ K^T

    mask = mask_ref[0].astype(f32)               # (1, L) additive, broadcast

    for h in range(heads_per_group):             # short unrolled per-head loop
        qh = q[:, h * hd:(h + 1) * hd]                                # (tq, hd)
        vh = vk_sc[:, pl.ds(h * hd, hd)]                              # (L, hd)
        kh = vk_sc[:, pl.ds(gsz + h * hd, hd)]                        # (L, hd)

        s = jax.lax.dot_general(qh, kh, (((1,), (1,)), ((), ())),
                                preferred_element_type=f32)           # (tq, L)
        s = s + mask
        m = jnp.max(s, axis=-1, keepdims=True)
        e = jnp.exp(s - m)                        # unnormalized probs, f32
        denom = jnp.sum(e, axis=-1, keepdims=True)

        # TODO(synk): attention-prob dropout (p=0.1) omitted — eval/inference
        # semantics; train mode would use pltpu.prng_seed/prng_random_bits.

        ctx = jnp.dot(e.astype(vh.dtype), vh, preferred_element_type=f32)
        # deferred softmax normalization: (tq, hd) multiply, EUP reciprocal
        ctx = ctx * pl.reciprocal(denom, approx=True)
        o_ref[0, :, pl.ds(h * hd, hd)] = ctx.astype(o_ref.dtype)


# ---------------------------------------------------------------------------
# Wrapper
# ---------------------------------------------------------------------------
def _pick_head_group(nh, hd, target):
    """Largest head-group (divisor of nh) whose lane width is a multiple of 128
    and <= target (MXU width).  Falls back to one group == all heads."""
    best = nh
    for hg in range(1, nh + 1):
        if nh % hg:
            continue
        gsz = hg * hd
        if gsz % 128 == 0 and gsz <= max(target, hd):
            best = hg
    return best


def _pick_qtile(L, cap=512):
    if L <= cap:
        return L
    for t in range(cap, 0, -8):
        if L % t == 0:
            return t
    return L


def self_attention(hidden_states, attention_mask, wq, wk, wv, bq, bk, bv,
                   num_attention_heads, encoder_y=None, q_tile=None,
                   mxu_width=256):
    """Forward pass of the PyTorch SelfAttention module (eval mode).

    hidden_states : (B, L, H)
    attention_mask: additive mask, (B, 1, 1, L) (BERT-style)
    wq/wk/wv      : (H, H) in `x @ W` orientation (== torch linear.weight.T)
    bq/bk/bv      : (H,)
    encoder_y     : optional (B, L, H); Q and V are projected from it and K
                    from hidden_states (matches the reference module).
    mxu_width     : 256 for v6e/v7x, 128 for v5e (head-group lane target).
    """
    bs, L, H = hidden_states.shape
    nh = num_attention_heads
    hd = H // nh
    in_dtype = hidden_states.dtype
    cross = encoder_y is not None

    hg = _pick_head_group(nh, hd, mxu_width)   # heads per group
    n_groups = nh // hg
    gsz = hg * hd                              # lane width of one head group

    tq = q_tile if q_tile is not None else _pick_qtile(L)
    assert L % tq == 0, f"q_tile {tq} must divide L {L}"
    n_q = L // tq

    # Fused per-group projection weights, column order [Q | V | K].
    def group_w(w):   # (H, H) -> (n_groups, H, gsz)
        return w.reshape(H, n_groups, gsz).transpose(1, 0, 2)

    def group_b(b):   # (H,) -> (n_groups, 1, gsz)
        return b.reshape(n_groups, 1, gsz)

    wqkv = jnp.concatenate([group_w(wq), group_w(wv), group_w(wk)],
                           axis=-1).astype(in_dtype)          # (G, H, 3*gsz)
    bqkv = jnp.concatenate([group_b(bq), group_b(bv), group_b(bk)],
                           axis=-1).astype(in_dtype)          # (G, 1, 3*gsz)

    mask3 = attention_mask.reshape(bs, 1, L)

    act_spec = pl.BlockSpec((1, L, H), lambda b, g, t: (b, 0, 0))
    mask_spec = pl.BlockSpec((1, 1, L), lambda b, g, t: (b, 0, 0))
    # Constant index_map -> weights/bias DMA'd once, VMEM-resident for the run.
    w_spec = pl.BlockSpec((n_groups, H, 3 * gsz), lambda b, g, t: (0, 0, 0))
    b_spec = pl.BlockSpec((n_groups, 1, 3 * gsz), lambda b, g, t: (0, 0, 0))
    # Lane-dense output written directly in (B, L, H) layout.
    out_spec = pl.BlockSpec((1, tq, gsz), lambda b, g, t: (b, t, g))

    if cross:
        operands = (encoder_y, hidden_states, mask3, wqkv, bqkv)
        in_specs = [act_spec, act_spec, mask_spec, w_spec, b_spec]
    else:
        operands = (hidden_states, mask3, wqkv, bqkv)
        in_specs = [act_spec, mask_spec, w_spec, b_spec]

    # VMEM budget (double-buffered inputs + resident weights + scratch + f32 temps)
    itm = jnp.dtype(in_dtype).itemsize
    mitm = jnp.dtype(attention_mask.dtype).itemsize
    est = ((2 if cross else 1) * 2 * L * H * itm        # activations
           + 2 * L * mitm                               # mask
           + 2 * 3 * H * H * itm + 2 * 3 * H * itm      # fused weights + bias
           + 2 * tq * gsz * itm                         # output block
           + 2 * L * gsz * itm                          # K/V scratch
           + 8 * tq * L * 4 + 8 * tq * gsz * 4)         # f32 softmax temporaries
    vmem_limit = int(min(max(2 * est, 8 * 1024 * 1024), 64 * 1024 * 1024))

    kern = functools.partial(_attn_kernel, gsz=gsz, hd=hd, heads_per_group=hg,
                             scale=1.0 / math.sqrt(hd), tq=tq, cross=cross)

    return pl.pallas_call(
        kern,
        out_shape=jax.ShapeDtypeStruct((bs, L, H), in_dtype),
        grid_spec=pltpu.PrefetchScalarGridSpec(
            num_scalar_prefetch=0,
            grid=(bs, n_groups, n_q),
            in_specs=in_specs,
            out_specs=out_spec,
            scratch_shapes=[pltpu.VMEM((L, 2 * gsz), in_dtype)],  # [V | K]
        ),
        compiler_params=pltpu.CompilerParams(
            dimension_semantics=("parallel", "parallel", "arbitrary"),
            vmem_limit_bytes=vmem_limit),
    )(*operands)


# ---------------------------------------------------------------------------
# Pure-JAX reference (matches the PyTorch module, eval mode)
# ---------------------------------------------------------------------------
def ref_self_attention(hidden_states, attention_mask, wq, wk, wv, bq, bk, bv,
                       nh, encoder_y=None):
    bs, L, H = hidden_states.shape
    hd = H // nh
    hi = jax.lax.Precision.HIGHEST
    xq = hidden_states if encoder_y is None else encoder_y
    q = jnp.dot(xq, wq, precision=hi) + bq
    k = jnp.dot(hidden_states, wk, precision=hi) + bk
    v = jnp.dot(xq, wv, precision=hi) + bv

    def split(t):
        return t.reshape(bs, L, nh, hd).transpose(0, 2, 1, 3)

    q, k, v = split(q), split(k), split(v)
    s = jnp.einsum('bhqd,bhkd->bhqk', q, k, precision=hi) / math.sqrt(hd)
    s = s + attention_mask                       # (B,1,1,L) broadcast
    p = jax.nn.softmax(s, axis=-1)
    ctx = jnp.einsum('bhqk,bhkd->bhqd', p, v, precision=hi)
    return ctx.transpose(0, 2, 1, 3).reshape(bs, L, H)


# ---------------------------------------------------------------------------
# Tests
# ---------------------------------------------------------------------------
if __name__ == "__main__":
    key = jax.random.PRNGKey(0)
    BS, H, NH = 2, 32, 8
    ks = jax.random.split(key, 9)

    def build(L):
        x = jax.random.normal(ks[0], (BS, L, H), dtype=jnp.float32)
        y = jax.random.normal(ks[1], (BS, L, H), dtype=jnp.float32)
        keep = jax.random.bernoulli(ks[2], 0.85, (BS, 1, 1, L))
        mask = jnp.where(keep, 0.0, -1e9).astype(jnp.float32)
        return x, y, mask

    wq = 0.1 * jax.random.normal(ks[3], (H, H), dtype=jnp.float32)
    wk = 0.1 * jax.random.normal(ks[4], (H, H), dtype=jnp.float32)
    wv = 0.1 * jax.random.normal(ks[5], (H, H), dtype=jnp.float32)
    bq = 0.1 * jax.random.normal(ks[6], (H,), dtype=jnp.float32)
    bk = 0.1 * jax.random.normal(ks[7], (H,), dtype=jnp.float32)
    bv = 0.1 * jax.random.normal(ks[8], (H,), dtype=jnp.float32)

    def check(name, out, ref, tol):
        out = jax.block_until_ready(out)
        err = float(jnp.max(jnp.abs(out.astype(jnp.float32) -
                                    ref.astype(jnp.float32))))
        assert err < tol, f"{name}: max abs error {err}"

    # 1) self-attention, single query tile
    x, _, mask = build(8)
    out = self_attention(x, mask, wq, wk, wv, bq, bk, bv, NH)
    ref = ref_self_attention(x, mask, wq, wk, wv, bq, bk, bv, NH)
    assert out.shape == x.shape and out.dtype == x.dtype
    check("self", out, ref, 2e-2)

    # 2) self-attention with a tiled query axis (exercises K/V scratch reuse)
    x16, _, mask16 = build(16)
    out = self_attention(x16, mask16, wq, wk, wv, bq, bk, bv, NH, q_tile=8)
    ref = ref_self_attention(x16, mask16, wq, wk, wv, bq, bk, bv, NH)
    check("self_tiled", out, ref, 2e-2)

    # 3) cross-attention (Q/V from encoder_y, K from hidden_states, as in module)
    x, y, mask = build(8)
    out = self_attention(x, mask, wq, wk, wv, bq, bk, bv, NH, encoder_y=y)
    ref = ref_self_attention(x, mask, wq, wk, wv, bq, bk, bv, NH, encoder_y=y)
    check("cross", out, ref, 2e-2)

    # 4) bf16 activations/weights: matmuls stay bf16 on the MXU, softmax in f32
    xb = x.astype(jnp.bfloat16)
    wargs = [a.astype(jnp.bfloat16) for a in (wq, wk, wv, bq, bk, bv)]
    out = self_attention(xb, mask, *wargs, NH)
    ref = ref_self_attention(xb.astype(jnp.float32), mask,
                             *[a.astype(jnp.float32) for a in wargs], NH)
    assert out.dtype == jnp.bfloat16
    check("bf16", out, ref, 1e-1)

    print("KERNEL_OK")
</pallas_src>

<mosaic_0001>
module attributes {stable_mosaic.version = 11 : i64} {
  func.func @_attn_kernel(%arg0: i32, %arg1: i32, %arg2: i32, %arg3: memref<1x8x32xf32, #tpu.memory_space<vmem>>, %arg4: memref<1x1x8xf32, #tpu.memory_space<vmem>>, %arg5: memref<1x32x96xf32, #tpu.memory_space<vmem>>, %arg6: memref<1x1x96xf32, #tpu.memory_space<vmem>>, %arg7: memref<1x8x32xf32, #tpu.memory_space<vmem>>, %arg8: memref<8x64xf32, #tpu.memory_space<vmem>>) attributes {dimension_semantics = [#tpu.dimension_semantics<parallel>, #tpu.dimension_semantics<parallel>, #tpu.dimension_semantics<arbitrary>], iteration_bounds = array<i64: 2, 1, 1>, scalar_prefetch = 0 : i64, scratch_operands = 1 : i64, tpu.core_type = #tpu.core_type<tc>, window_params = [{transform_indices = @transform_0, window_bounds = array<i64: 1, 8, 32>}, {transform_indices = @transform_1, window_bounds = array<i64: 1, 1, 8>}, {pipeline_mode = #tpu.pipeline_mode<synchronous>, transform_indices = @transform_2, window_bounds = array<i64: 1, 32, 96>}, {pipeline_mode = #tpu.pipeline_mode<synchronous>, transform_indices = @transform_3, window_bounds = array<i64: 1, 1, 96>}, {transform_indices = @transform_4, window_bounds = array<i64: 1, 8, 32>}]} {
    %c0_i32 = arith.constant 0 : i32
    %0 = arith.cmpi eq, %arg2, %c0_i32 : i32
    %1 = arith.extui %0 : i1 to i32
    %c0_i32_0 = arith.constant 0 : i32
    %2 = arith.cmpi ne, %1, %c0_i32_0 : i32
    scf.if %2 {
      %c0_83 = arith.constant 0 : index
      %c0_84 = arith.constant 0 : index
      %c0_85 = arith.constant 0 : index
      %181 = vector.load %arg3[%c0_83, %c0_84, %c0_85] : memref<1x8x32xf32, #tpu.memory_space<vmem>>, vector<1x8x32xf32>
      %182 = vector.shape_cast %181 : vector<1x8x32xf32> to vector<8x32xf32>
      %183 = arith.index_cast %arg1 : i32 to index
      %c0_86 = arith.constant 0 : index
      %c32_87 = arith.constant 32 : index
      %184 = vector.load %arg5[%183, %c0_86, %c32_87] : memref<1x32x96xf32, #tpu.memory_space<vmem>>, vector<1x32x64xf32>
      %185 = vector.shape_cast %184 : vector<1x32x64xf32> to vector<32x64xf32>
      %cst_88 = arith.constant dense<0.000000e+00> : vector<8x64xf32>
      %186 = tpu.matmul %182, %185, %cst_88 {dimension_numbers = #tpu.dot_dimension_numbers<[1], [0], [0], [1], [0, 0, 1, 1], [], []>} : vector<8x32xf32>, vector<32x64xf32>, vector<8x64xf32> -> vector<8x64xf32>
      %187 = arith.index_cast %arg1 : i32 to index
      %c0_89 = arith.constant 0 : index
      %c32_90 = arith.constant 32 : index
      %188 = vector.load %arg6[%187, %c0_89, %c32_90] : memref<1x1x96xf32, #tpu.memory_space<vmem>>, vector<1x1x64xf32>
      %189 = vector.shape_cast %188 : vector<1x1x64xf32> to vector<1x64xf32>
      %190 = vector.broadcast %189 : vector<1x64xf32> to vector<8x64xf32>
      %191 = arith.addf %186, %190 : vector<8x64xf32>
      %c0_91 = arith.constant 0 : index
      %c0_92 = arith.constant 0 : index
      %192 = vector.load %arg8[%c0_91, %c0_92] : memref<8x64xf32, #tpu.memory_space<vmem>>, vector<8x64xf32>
      tpu.vector_store %arg8[%c0_91, %c0_92], %191 {strides = array<i32>} : memref<8x64xf32, #tpu.memory_space<vmem>>, vector<8x64xf32>,
    } else {
    }
    %c8_i32 = arith.constant 8 : i32
    %3 = arith.muli %arg2, %c8_i32 : i32
    %4 = tpu.assume_multiple %3, 8 : i32
    %c0 = arith.constant 0 : index
    %5 = arith.index_cast %4 : i32 to index
    %c0_1 = arith.constant 0 : index
    %6 = vector.load %arg3[%c0, %5, %c0_1] : memref<1x8x32xf32, #tpu.memory_space<vmem>>, vector<1x8x32xf32>
    %7 = vector.shape_cast %6 : vector<1x8x32xf32> to vector<8x32xf32>
    %8 = arith.index_cast %arg1 : i32 to index
    %c0_2 = arith.constant 0 : index
    %c0_3 = arith.constant 0 : index
    %9 = vector.load %arg5[%8, %c0_2, %c0_3] : memref<1x32x96xf32, #tpu.memory_space<vmem>>, vector<1x32x32xf32>
    %10 = vector.shape_cast %9 : vector<1x32x32xf32> to vector<32x32xf32>
    %cst = arith.constant dense<0.000000e+00> : vector<8x32xf32>
    %11 = tpu.matmul %7, %10, %cst {dimension_numbers = #tpu.dot_dimension_numbers<[1], [0], [0], [1], [0, 0, 1, 1], [], []>} : vector<8x32xf32>, vector<32x32xf32>, vector<8x32xf32> -> vector<8x32xf32>
    %12 = arith.index_cast %arg1 : i32 to index
    %c0_4 = arith.constant 0 : index
    %c0_5 = arith.constant 0 : index
    %13 = vector.load %arg6[%12, %c0_4, %c0_5] : memref<1x1x96xf32, #tpu.memory_space<vmem>>, vector<1x1x32xf32>
    %14 = vector.shape_cast %13 : vector<1x1x32xf32> to vector<1x32xf32>
    %15 = vector.broadcast %14 : vector<1x32xf32> to vector<8x32xf32>
    %16 = arith.addf %11, %15 : vector<8x32xf32>
    %cst_6 = arith.constant 5.000000e-01 : f32
    %17 = vector.broadcast %cst_6 : f32 to vector<8x32xf32>
    %18 = arith.mulf %16, %17 : vector<8x32xf32>
    %c0_7 = arith.constant 0 : index
    %c0_8 = arith.constant 0 : index
    %c0_9 = arith.constant 0 : index
    %19 = vector.load %arg4[%c0_7, %c0_8, %c0_9] : memref<1x1x8xf32, #tpu.memory_space<vmem>>, vector<1x1x8xf32>
    %20 = vector.shape_cast %19 : vector<1x1x8xf32> to vector<1x8xf32>
    %21 = vector.extract_strided_slice %18 {offsets = [0, 0], sizes = [8, 4], strides = [1, 1]} : vector<8x32xf32> to vector<8x4xf32>
    %c0_10 = arith.constant 0 : index
    %c0_11 = arith.constant 0 : index
    %22 = vector.load %arg8[%c0_10, %c0_11] : memref<8x64xf32, #tpu.memory_space<vmem>>, vector<8x4xf32>
    %c0_12 = arith.constant 0 : index
    %c32 = arith.constant 32 : index
    %23 = vector.load %arg8[%c0_12, %c32] : memref<8x64xf32, #tpu.memory_space<vmem>>, vector<8x4xf32>
    %cst_13 = arith.constant dense<0.000000e+00> : vector<8x8xf32>
    %24 = tpu.matmul %21, %23, %cst_13 {dimension_numbers = #tpu.dot_dimension_numbers<[1], [1], [0], [0], [0, 0, 1, 0], [], []>} : vector<8x4xf32>, vector<8x4xf32>, vector<8x8xf32> -> vector<8x8xf32>
    %25 = vector.broadcast %20 : vector<1x8xf32> to vector<8x8xf32>
    %26 = arith.addf %24, %25 : vector<8x8xf32>
    %cst_14 = arith.constant dense<0xFF800000> : vector<8xf32>
    %27 = vector.multi_reduction <maximumf>, %26, %cst_14 [1] : vector<8x8xf32> to vector<8xf32>
    %28 = vector.shape_cast %27 : vector<8xf32> to vector<8x1xf32>
    %29 = vector.broadcast %28 : vector<8x1xf32> to vector<8x8xf32>
    %30 = arith.subf %26, %29 : vector<8x8xf32>
    %31 = math.exp %30 : vector<8x8xf32>
    %cst_15 = arith.constant dense<0.000000e+00> : vector<8xf32>
    %32 = vector.multi_reduction <add>, %31, %cst_15 [1] : vector<8x8xf32> to vector<8xf32>
    %33 = vector.shape_cast %32 : vector<8xf32> to vector<8x1xf32>
    %cst_16 = arith.constant dense<0.000000e+00> : vector<8x4xf32>
    %34 = tpu.matmul %31, %22, %cst_16 {dimension_numbers = #tpu.dot_dimension_numbers<[1], [0], [0], [1], [0, 0, 1, 1], [], []>} : vector<8x8xf32>, vector<8x4xf32>, vector<8x4xf32> -> vector<8x4xf32>
    %35 = tpu.reciprocal %33 {approx = true} : vector<8x1xf32> -> vector<8x1xf32>
    %36 = vector.broadcast %35 : vector<8x1xf32> to vector<8x4xf32>
    %37 = arith.mulf %34, %36 : vector<8x4xf32>
    %c0_17 = arith.constant 0 : index
    %c0_18 = arith.constant 0 : index
    %c0_19 = arith.constant 0 : index
    %38 = vector.load %arg7[%c0_17, %c0_18, %c0_19] : memref<1x8x32xf32, #tpu.memory_space<vmem>>, vector<1x8x4xf32>
    %39 = vector.shape_cast %38 : vector<1x8x4xf32> to vector<8x4xf32>
    %40 = vector.shape_cast %37 : vector<8x4xf32> to vector<1x8x4xf32>
    tpu.vector_store %arg7[%c0_17, %c0_18, %c0_19], %40 {strides = array<i32>} : memref<1x8x32xf32, #tpu.memory_space<vmem>>, vector<1x8x4xf32>,
    %41 = vector.extract_strided_slice %18 {offsets = [0, 4], sizes = [8, 4], strides = [1, 1]} : vector<8x32xf32> to vector<8x4xf32>
    %c0_20 = arith.constant 0 : index
    %c4 = arith.constant 4 : index
    %42 = vector.load %arg8[%c0_20, %c4] : memref<8x64xf32, #tpu.memory_space<vmem>>, vector<8x4xf32>
    %c0_21 = arith.constant 0 : index
    %c36 = arith.constant 36 : index
    %43 = vector.load %arg8[%c0_21, %c36] : memref<8x64xf32, #tpu.memory_space<vmem>>, vector<8x4xf32>
    %cst_22 = arith.constant dense<0.000000e+00> : vector<8x8xf32>
    %44 = tpu.matmul %41, %43, %cst_22 {dimension_numbers = #tpu.dot_dimension_numbers<[1], [1], [0], [0], [0, 0, 1, 0], [], []>} : vector<8x4xf32>, vector<8x4xf32>, vector<8x8xf32> -> vector<8x8xf32>
    %45 = vector.broadcast %20 : vector<1x8xf32> to vector<8x8xf32>
    %46 = arith.addf %44, %45 : vector<8x8xf32>
    %cst_23 = arith.constant dense<0xFF800000> : vector<8xf32>
    %47 = vector.multi_reduction <maximumf>, %46, %cst_23 [1] : vector<8x8xf32> to vector<8xf32>
    %48 = vector.shape_cast %47 : vector<8xf32> to vector<8x1xf32>
    %49 = vector.broadcast %48 : vector<8x1xf32> to vector<8x8xf32>
    %50 = arith.subf %46, %49 : vector<8x8xf32>
    %51 = math.exp %50 : vector<8x8xf32>
    %cst_24 = arith.constant dense<0.000000e+00> : vector<8xf32>
    %52 = vector.multi_reduction <add>, %51, %cst_24 [1] : vector<8x8xf32> to vector<8xf32>
    %53 = vector.shape_cast %52 : vector<8xf32> to vector<8x1xf32>
    %cst_25 = arith.constant dense<0.000000e+00> : vector<8x4xf32>
    %54 = tpu.matmul %51, %42, %cst_25 {dimension_numbers = #tpu.dot_dimension_numbers<[1], [0], [0], [1], [0, 0, 1, 1], [], []>} : vector<8x8xf32>, vector<8x4xf32>, vector<8x4xf32> -> vector<8x4xf32>
    %55 = tpu.reciprocal %53 {approx = true} : vector<8x1xf32> -> vector<8x1xf32>
    %56 = vector.broadcast %55 : vector<8x1xf32> to vector<8x4xf32>
    %57 = arith.mulf %54, %56 : vector<8x4xf32>
    %c0_26 = arith.constant 0 : index
    %c0_27 = arith.constant 0 : index
    %c4_28 = arith.constant 4 : index
    %58 = vector.load %arg7[%c0_26, %c0_27, %c4_28] : memref<1x8x32xf32, #tpu.memory_space<vmem>>, vector<1x8x4xf32>
    %59 = vector.shape_cast %58 : vector<1x8x4xf32> to vector<8x4xf32>
    %60 = vector.shape_cast %57 : vector<8x4xf32> to vector<1x8x4xf32>
    tpu.vector_store %arg7[%c0_26, %c0_27, %c4_28], %60 {strides = array<i32>} : memref<1x8x32xf32, #tpu.memory_space<vmem>>, vector<1x8x4xf32>,
    %61 = vector.extract_strided_slice %18 {offsets = [0, 8], sizes = [8, 4], strides = [1, 1]} : vector<8x32xf32> to vector<8x4xf32>
    %c0_29 = arith.constant 0 : index
    %c8 = arith.constant 8 : index
    %62 = vector.load %arg8[%c0_29, %c8] : memref<8x64xf32, #tpu.memory_space<vmem>>, vector<8x4xf32>
    %c0_30 = arith.constant 0 : index
    %c40 = arith.constant 40 : index
    %63 = vector.load %arg8[%c0_30, %c40] : memref<8x64xf32, #tpu.memory_space<vmem>>, vector<8x4xf32>
    %cst_31 = arith.constant dense<0.000000e+00> : vector<8x8xf32>
    %64 = tpu.matmul %61, %63, %cst_31 {dimension_numbers = #tpu.dot_dimension_numbers<[1], [1], [0], [0], [0, 0, 1, 0], [], []>} : vector<8x4xf32>, vector<8x4xf32>, vector<8x8xf32> -> vector<8x8xf32>
    %65 = vector.broadcast %20 : vector<1x8xf32> to vector<8x8xf32>
    %66 = arith.addf %64, %65 : vector<8x8xf32>
    %cst_32 = arith.constant dense<0xFF800000> : vector<8xf32>
    %67 = vector.multi_reduction <maximumf>, %66, %cst_32 [1] : vector<8x8xf32> to vector<8xf32>
    %68 = vector.shape_cast %67 : vector<8xf32> to vector<8x1xf32>
    %69 = vector.broadcast %68 : vector<8x1xf32> to vector<8x8xf32>
    %70 = arith.subf %66, %69 : vector<8x8xf32>
    %71 = math.exp %70 : vector<8x8xf32>
    %cst_33 = arith.constant dense<0.000000e+00> : vector<8xf32>
    %72 = vector.multi_reduction <add>, %71, %cst_33 [1] : vector<8x8xf32> to vector<8xf32>
    %73 = vector.shape_cast %72 : vector<8xf32> to vector<8x1xf32>
    %cst_34 = arith.constant dense<0.000000e+00> : vector<8x4xf32>
    %74 = tpu.matmul %71, %62, %cst_34 {dimension_numbers = #tpu.dot_dimension_numbers<[1], [0], [0], [1], [0, 0, 1, 1], [], []>} : vector<8x8xf32>, vector<8x4xf32>, vector<8x4xf32> -> vector<8x4xf32>
    %75 = tpu.reciprocal %73 {approx = true} : vector<8x1xf32> -> vector<8x1xf32>
    %76 = vector.broadcast %75 : vector<8x1xf32> to vector<8x4xf32>
    %77 = arith.mulf %74, %76 : vector<8x4xf32>
    %c0_35 = arith.constant 0 : index
    %c0_36 = arith.constant 0 : index
    %c8_37 = arith.constant 8 : index
    %78 = vector.load %arg7[%c0_35, %c0_36, %c8_37] : memref<1x8x32xf32, #tpu.memory_space<vmem>>, vector<1x8x4xf32>
    %79 = vector.shape_cast %78 : vector<1x8x4xf32> to vector<8x4xf32>
    %80 = vector.shape_cast %77 : vector<8x4xf32> to vector<1x8x4xf32>
    tpu.vector_store %arg7[%c0_35, %c0_36, %c8_37], %80 {strides = array<i32>} : memref<1x8x32xf32, #tpu.memory_space<vmem>>, vector<1x8x4xf32>,
    %81 = vector.extract_strided_slice %18 {offsets = [0, 12], sizes = [8, 4], strides = [1, 1]} : vector<8x32xf32> to vector<8x4xf32>
    %c0_38 = arith.constant 0 : index
    %c12 = arith.constant 12 : index
    %82 = vector.load %arg8[%c0_38, %c12] : memref<8x64xf32, #tpu.memory_space<vmem>>, vector<8x4xf32>
    %c0_39 = arith.constant 0 : index
    %c44 = arith.constant 44 : index
    %83 = vector.load %arg8[%c0_39, %c44] : memref<8x64xf32, #tpu.memory_space<vmem>>, vector<8x4xf32>
    %cst_40 = arith.constant dense<0.000000e+00> : vector<8x8xf32>
    %84 = tpu.matmul %81, %83, %cst_40 {dimension_numbers = #tpu.dot_dimension_numbers<[1], [1], [0], [0], [0, 0, 1, 0], [], []>} : vector<8x4xf32>, vector<8x4xf32>, vector<8x8xf32> -> vector<8x8xf32>
    %85 = vector.broadcast %20 : vector<1x8xf32> to vector<8x8xf32>
    %86 = arith.addf %84, %85 : vector<8x8xf32>
    %cst_41 = arith.constant dense<0xFF800000> : vector<8xf32>
    %87 = vector.multi_reduction <maximumf>, %86, %cst_41 [1] : vector<8x8xf32> to vector<8xf32>
    %88 = vector.shape_cast %87 : vector<8xf32> to vector<8x1xf32>
    %89 = vector.broadcast %88 : vector<8x1xf32> to vector<8x8xf32>
    %90 = arith.subf %86, %89 : vector<8x8xf32>
    %91 = math.exp %90 : vector<8x8xf32>
    %cst_42 = arith.constant dense<0.000000e+00> : vector<8xf32>
    %92 = vector.multi_reduction <add>, %91, %cst_42 [1] : vector<8x8xf32> to vector<8xf32>
    %93 = vector.shape_cast %92 : vector<8xf32> to vector<8x1xf32>
    %cst_43 = arith.constant dense<0.000000e+00> : vector<8x4xf32>
    %94 = tpu.matmul %91, %82, %cst_43 {dimension_numbers = #tpu.dot_dimension_numbers<[1], [0], [0], [1], [0, 0, 1, 1], [], []>} : vector<8x8xf32>, vector<8x4xf32>, vector<8x4xf32> -> vector<8x4xf32>
    %95 = tpu.reciprocal %93 {approx = true} : vector<8x1xf32> -> vector<8x1xf32>
    %96 = vector.broadcast %95 : vector<8x1xf32> to vector<8x4xf32>
    %97 = arith.mulf %94, %96 : vector<8x4xf32>
    %c0_44 = arith.constant 0 : index
    %c0_45 = arith.constant 0 : index
    %c12_46 = arith.constant 12 : index
    %98 = vector.load %arg7[%c0_44, %c0_45, %c12_46] : memref<1x8x32xf32, #tpu.memory_space<vmem>>, vector<1x8x4xf32>
    %99 = vector.shape_cast %98 : vector<1x8x4xf32> to vector<8x4xf32>
    %100 = vector.shape_cast %97 : vector<8x4xf32> to vector<1x8x4xf32>
    tpu.vector_store %arg7[%c0_44, %c0_45, %c12_46], %100 {strides = array<i32>} : memref<1x8x32xf32, #tpu.memory_space<vmem>>, vector<1x8x4xf32>,
    %101 = vector.extract_strided_slice %18 {offsets = [0, 16], sizes = [8, 4], strides = [1, 1]} : vector<8x32xf32> to vector<8x4xf32>
    %c0_47 = arith.constant 0 : index
    %c16 = arith.constant 16 : index
    %102 = vector.load %arg8[%c0_47, %c16] : memref<8x64xf32, #tpu.memory_space<vmem>>, vector<8x4xf32>
    %c0_48 = arith.constant 0 : index
    %c48 = arith.constant 48 : index
    %103 = vector.load %arg8[%c0_48, %c48] : memref<8x64xf32, #tpu.memory_space<vmem>>, vector<8x4xf32>
    %cst_49 = arith.constant dense<0.000000e+00> : vector<8x8xf32>
    %104 = tpu.matmul %101, %103, %cst_49 {dimension_numbers = #tpu.dot_dimension_numbers<[1], [1], [0], [0], [0, 0, 1, 0], [], []>} : vector<8x4xf32>, vector<8x4xf32>, vector<8x8xf32> -> vector<8x8xf32>
    %105 = vector.broadcast %20 : vector<1x8xf32> to vector<8x8xf32>
    %106 = arith.addf %104, %105 : vector<8x8xf32>
    %cst_50 = arith.constant dense<0xFF800000> : vector<8xf32>
    %107 = vector.multi_reduction <maximumf>, %106, %cst_50 [1] : vector<8x8xf32> to vector<8xf32>
    %108 = vector.shape_cast %107 : vector<8xf32> to vector<8x1xf32>
    %109 = vector.broadcast %108 : vector<8x1xf32> to vector<8x8xf32>
    %110 = arith.subf %106, %109 : vector<8x8xf32>
    %111 = math.exp %110 : vector<8x8xf32>
    %cst_51 = arith.constant dense<0.000000e+00> : vector<8xf32>
    %112 = vector.multi_reduction <add>, %111, %cst_51 [1] : vector<8x8xf32> to vector<8xf32>
    %113 = vector.shape_cast %112 : vector<8xf32> to vector<8x1xf32>
    %cst_52 = arith.constant dense<0.000000e+00> : vector<8x4xf32>
    %114 = tpu.matmul %111, %102, %cst_52 {dimension_numbers = #tpu.dot_dimension_numbers<[1], [0], [0], [1], [0, 0, 1, 1], [], []>} : vector<8x8xf32>, vector<8x4xf32>, vector<8x4xf32> -> vector<8x4xf32>
    %115 = tpu.reciprocal %113 {approx = true} : vector<8x1xf32> -> vector<8x1xf32>
    %116 = vector.broadcast %115 : vector<8x1xf32> to vector<8x4xf32>
    %117 = arith.mulf %114, %116 : vector<8x4xf32>
    %c0_53 = arith.constant 0 : index
    %c0_54 = arith.constant 0 : index
    %c16_55 = arith.constant 16 : index
    %118 = vector.load %arg7[%c0_53, %c0_54, %c16_55] : memref<1x8x32xf32, #tpu.memory_space<vmem>>, vector<1x8x4xf32>
    %119 = vector.shape_cast %118 : vector<1x8x4xf32> to vector<8x4xf32>
    %120 = vector.shape_cast %117 : vector<8x4xf32> to vector<1x8x4xf32>
    tpu.vector_store %arg7[%c0_53, %c0_54, %c16_55], %120 {strides = array<i32>} : memref<1x8x32xf32, #tpu.memory_space<vmem>>, vector<1x8x4xf32>,
    %121 = vector.extract_strided_slice %18 {offsets = [0, 20], sizes = [8, 4], strides = [1, 1]} : vector<8x32xf32> to vector<8x4xf32>
    %c0_56 = arith.constant 0 : index
    %c20 = arith.constant 20 : index
    %122 = vector.load %arg8[%c0_56, %c20] : memref<8x64xf32, #tpu.memory_space<vmem>>, vector<8x4xf32>
    %c0_57 = arith.constant 0 : index
    %c52 = arith.constant 52 : index
    %123 = vector.load %arg8[%c0_57, %c52] : memref<8x64xf32, #tpu.memory_space<vmem>>, vector<8x4xf32>
    %cst_58 = arith.constant dense<0.000000e+00> : vector<8x8xf32>
    %124 = tpu.matmul %121, %123, %cst_58 {dimension_numbers = #tpu.dot_dimension_numbers<[1], [1], [0], [0], [0, 0, 1, 0], [], []>} : vector<8x4xf32>, vector<8x4xf32>, vector<8x8xf32> -> vector<8x8xf32>
    %125 = vector.broadcast %20 : vector<1x8xf32> to vector<8x8xf32>
    %126 = arith.addf %124, %125 : vector<8x8xf32>
    %cst_59 = arith.constant dense<0xFF800000> : vector<8xf32>
    %127 = vector.multi_reduction <maximumf>, %126, %cst_59 [1] : vector<8x8xf32> to vector<8xf32>
    %128 = vector.shape_cast %127 : vector<8xf32> to vector<8x1xf32>
    %129 = vector.broadcast %128 : vector<8x1xf32> to vector<8x8xf32>
    %130 = arith.subf %126, %129 : vector<8x8xf32>
    %131 = math.exp %130 : vector<8x8xf32>
    %cst_60 = arith.constant dense<0.000000e+00> : vector<8xf32>
    %132 = vector.multi_reduction <add>, %131, %cst_60 [1] : vector<8x8xf32> to vector<8xf32>
    %133 = vector.shape_cast %132 : vector<8xf32> to vector<8x1xf32>
    %cst_61 = arith.constant dense<0.000000e+00> : vector<8x4xf32>
    %134 = tpu.matmul %131, %122, %cst_61 {dimension_numbers = #tpu.dot_dimension_numbers<[1], [0], [0], [1], [0, 0, 1, 1], [], []>} : vector<8x8xf32>, vector<8x4xf32>, vector<8x4xf32> -> vector<8x4xf32>
    %135 = tpu.reciprocal %133 {approx = true} : vector<8x1xf32> -> vector<8x1xf32>
    %136 = vector.broadcast %135 : vector<8x1xf32> to vector<8x4xf32>
    %137 = arith.mulf %134, %136 : vector<8x4xf32>
    %c0_62 = arith.constant 0 : index
    %c0_63 = arith.constant 0 : index
    %c20_64 = arith.constant 20 : index
    %138 = vector.load %arg7[%c0_62, %c0_63, %c20_64] : memref<1x8x32xf32, #tpu.memory_space<vmem>>, vector<1x8x4xf32>
    %139 = vector.shape_cast %138 : vector<1x8x4xf32> to vector<8x4xf32>
    %140 = vector.shape_cast %137 : vector<8x4xf32> to vector<1x8x4xf32>
    tpu.vector_store %arg7[%c0_62, %c0_63, %c20_64], %140 {strides = array<i32>} : memref<1x8x32xf32, #tpu.memory_space<vmem>>, vector<1x8x4xf32>,
    %141 = vector.extract_strided_slice %18 {offsets = [0, 24], sizes = [8, 4], strides = [1, 1]} : vector<8x32xf32> to vector<8x4xf32>
    %c0_65 = arith.constant 0 : index
    %c24 = arith.constant 24 : index
    %142 = vector.load %arg8[%c0_65, %c24] : memref<8x64xf32, #tpu.memory_space<vmem>>, vector<8x4xf32>
    %c0_66 = arith.constant 0 : index
    %c56 = arith.constant 56 : index
    %143 = vector.load %arg8[%c0_66, %c56] : memref<8x64xf32, #tpu.memory_space<vmem>>, vector<8x4xf32>
    %cst_67 = arith.constant dense<0.000000e+00> : vector<8x8xf32>
    %144 = tpu.matmul %141, %143, %cst_67 {dimension_numbers = #tpu.dot_dimension_numbers<[1], [1], [0], [0], [0, 0, 1, 0], [], []>} : vector<8x4xf32>, vector<8x4xf32>, vector<8x8xf32> -> vector<8x8xf32>
    %145 = vector.broadcast %20 : vector<1x8xf32> to vector<8x8xf32>
    %146 = arith.addf %144, %145 : vector<8x8xf32>
    %cst_68 = arith.constant dense<0xFF800000> : vector<8xf32>
    %147 = vector.multi_reduction <maximumf>, %146, %cst_68 [1] : vector<8x8xf32> to vector<8xf32>
    %148 = vector.shape_cast %147 : vector<8xf32> to vector<8x1xf32>
    %149 = vector.broadcast %148 : vector<8x1xf32> to vector<8x8xf32>
    %150 = arith.subf %146, %149 : vector<8x8xf32>
    %151 = math.exp %150 : vector<8x8xf32>
    %cst_69 = arith.constant dense<0.000000e+00> : vector<8xf32>
    %152 = vector.multi_reduction <add>, %151, %cst_69 [1] : vector<8x8xf32> to vector<8xf32>
    %153 = vector.shape_cast %152 : vector<8xf32> to vector<8x1xf32>
    %cst_70 = arith.constant dense<0.000000e+00> : vector<8x4xf32>
    %154 = tpu.matmul %151, %142, %cst_70 {dimension_numbers = #tpu.dot_dimension_numbers<[1], [0], [0], [1], [0, 0, 1, 1], [], []>} : vector<8x8xf32>, vector<8x4xf32>, vector<8x4xf32> -> vector<8x4xf32>
    %155 = tpu.reciprocal %153 {approx = true} : vector<8x1xf32> -> vector<8x1xf32>
    %156 = vector.broadcast %155 : vector<8x1xf32> to vector<8x4xf32>
    %157 = arith.mulf %154, %156 : vector<8x4xf32>
    %c0_71 = arith.constant 0 : index
    %c0_72 = arith.constant 0 : index
    %c24_73 = arith.constant 24 : index
    %158 = vector.load %arg7[%c0_71, %c0_72, %c24_73] : memref<1x8x32xf32, #tpu.memory_space<vmem>>, vector<1x8x4xf32>
    %159 = vector.shape_cast %158 : vector<1x8x4xf32> to vector<8x4xf32>
    %160 = vector.shape_cast %157 : vector<8x4xf32> to vector<1x8x4xf32>
    tpu.vector_store %arg7[%c0_71, %c0_72, %c24_73], %160 {strides = array<i32>} : memref<1x8x32xf32, #tpu.memory_space<vmem>>, vector<1x8x4xf32>,
    %161 = vector.extract_strided_slice %18 {offsets = [0, 28], sizes = [8, 4], strides = [1, 1]} : vector<8x32xf32> to vector<8x4xf32>
    %c0_74 = arith.constant 0 : index
    %c28 = arith.constant 28 : index
    %162 = vector.load %arg8[%c0_74, %c28] : memref<8x64xf32, #tpu.memory_space<vmem>>, vector<8x4xf32>
    %c0_75 = arith.constant 0 : index
    %c60 = arith.constant 60 : index
    %163 = vector.load %arg8[%c0_75, %c60] : memref<8x64xf32, #tpu.memory_space<vmem>>, vector<8x4xf32>
    %cst_76 = arith.constant dense<0.000000e+00> : vector<8x8xf32>
    %164 = tpu.matmul %161, %163, %cst_76 {dimension_numbers = #tpu.dot_dimension_numbers<[1], [1], [0], [0], [0, 0, 1, 0], [], []>} : vector<8x4xf32>, vector<8x4xf32>, vector<8x8xf32> -> vector<8x8xf32>
    %165 = vector.broadcast %20 : vector<1x8xf32> to vector<8x8xf32>
    %166 = arith.addf %164, %165 : vector<8x8xf32>
    %cst_77 = arith.constant dense<0xFF800000> : vector<8xf32>
    %167 = vector.multi_reduction <maximumf>, %166, %cst_77 [1] : vector<8x8xf32> to vector<8xf32>
    %168 = vector.shape_cast %167 : vector<8xf32> to vector<8x1xf32>
    %169 = vector.broadcast %168 : vector<8x1xf32> to vector<8x8xf32>
    %170 = arith.subf %166, %169 : vector<8x8xf32>
    %171 = math.exp %170 : vector<8x8xf32>
    %cst_78 = arith.constant dense<0.000000e+00> : vector<8xf32>
    %172 = vector.multi_reduction <add>, %171, %cst_78 [1] : vector<8x8xf32> to vector<8xf32>
    %173 = vector.shape_cast %172 : vector<8xf32> to vector<8x1xf32>
    %cst_79 = arith.constant dense<0.000000e+00> : vector<8x4xf32>
    %174 = tpu.matmul %171, %162, %cst_79 {dimension_numbers = #tpu.dot_dimension_numbers<[1], [0], [0], [1], [0, 0, 1, 1], [], []>} : vector<8x8xf32>, vector<8x4xf32>, vector<8x4xf32> -> vector<8x4xf32>
    %175 = tpu.reciprocal %173 {approx = true} : vector<8x1xf32> -> vector<8x1xf32>
    %176 = vector.broadcast %175 : vector<8x1xf32> to vector<8x4xf32>
    %177 = arith.mulf %174, %176 : vector<8x4xf32>
    %c0_80 = arith.constant 0 : index
    %c0_81 = arith.constant 0 : index
    %c28_82 = arith.constant 28 : index
    %178 = vector.load %arg7[%c0_80, %c0_81, %c28_82] : memref<1x8x32xf32, #tpu.memory_space<vmem>>, vector<1x8x4xf32>
    %179 = vector.shape_cast %178 : vector<1x8x4xf32> to vector<8x4xf32>
    %180 = vector.shape_cast %177 : vector<8x4xf32> to vector<1x8x4xf32>
    tpu.vector_store %arg7[%c0_80, %c0_81, %c28_82], %180 {strides = array<i32>} : memref<1x8x32xf32, #tpu.memory_space<vmem>>, vector<1x8x4xf32>,
    return
  }
  func.func @transform_0(%arg0: i32, %arg1: i32, %arg2: i32) -> (i32, i32, i32) {
    %c0_i32 = arith.constant 0 : i32
    %c0_i32_0 = arith.constant 0 : i32
    %c0_i32_1 = arith.constant 0 : i32
    return %arg0, %c0_i32, %c0_i32_0 : i32, i32, i32
  }
  func.func @transform_1(%arg0: i32, %arg1: i32, %arg2: i32) -> (i32, i32, i32) {
    %c0_i32 = arith.constant 0 : i32
    %c0_i32_0 = arith.constant 0 : i32
    %c0_i32_1 = arith.constant 0 : i32
    return %arg0, %c0_i32, %c0_i32_0 : i32, i32, i32
  }
  func.func @transform_2(%arg0: i32, %arg1: i32, %arg2: i32) -> (i32, i32, i32) {
    %c0_i32 = arith.constant 0 : i32
    %c0_i32_0 = arith.constant 0 : i32
    %c0_i32_1 = arith.constant 0 : i32
    %c0_i32_2 = arith.constant 0 : i32
    return %c0_i32, %c0_i32_0, %c0_i32_1 : i32, i32, i32
  }
  func.func @transform_3(%arg0: i32, %arg1: i32, %arg2: i32) -> (i32, i32, i32) {
    %c0_i32 = arith.constant 0 : i32
    %c0_i32_0 = arith.constant 0 : i32
    %c0_i32_1 = arith.constant 0 : i32
    %c0_i32_2 = arith.constant 0 : i32
    return %c0_i32, %c0_i32_0, %c0_i32_1 : i32, i32, i32
  }
  func.func @transform_4(%arg0: i32, %arg1: i32, %arg2: i32) -> (i32, i32, i32) {
    %c0_i32 = arith.constant 0 : i32
    return %arg0, %arg2, %arg1 : i32, i32, i32
  }
}

</mosaic_0001>

<llo_original>
// kernel: tpu_custom_call.1
$region0: #{tpu_custom_call.1}
  #allocation0 [shape = 'u32[]', space=smem, size = 0x4, offset = 0x4, fixed_abs, tag = 'smem constant byte address 0x4 - core index']
  #allocation1 [shape = 'u32[72,128]{1,0:T(1,128)}', space=vmem, size = 0x9000, scoped, tag = 'internal scratch']
  #allocation2 [shape = 'f32[8,64]{1,0:T(8,128)}', space=vmem, size = 0x1000, scoped, tag = 'scratch operand']
  %s0 = inlined_call_operand.hbm [shape: f32[2,8,32], index: 0, kind: input, shape index: {}]
  %s1 = inlined_call_operand.hbm [shape: f32[2,1,8], index: 1, kind: input, shape index: {}]
  %s2 = inlined_call_operand.hbm [shape: f32[1,32,96], index: 2, kind: input, shape index: {}]
  %s3 = inlined_call_operand.vmem [shape: f32[1,1,96], index: 3, kind: input, shape index: {}]
  %s4 = inlined_call_operand.hbm [shape: f32[2,8,32], index: 4, kind: output, shape index: {}]
  %s5 = sld [smem:[#allocation0]]
  $region65: #{tpu_custom_call.1} parent=0
    _
  %s7 = ssub.s32 1, %s5
  %s8 = scalar_select 0, %s7, %s5
  $region1: #{tpu_custom_call.1} parent=0
    #allocation3 [shape = 'u8[8192]{0}', space=vmem, size = 0x2000, scoped, tag = 'input window, operand 0']
    #allocation4 [shape = 's32[2]{0}', space=sflag, size = 0x8, scoped, tag = 'scoped memory for tpu_custom_call.1']
    #allocation5 [shape = 's32[2]{0}', space=sflag, size = 0x8, scoped, tag = 'scoped memory for tpu_custom_call.1']
    #allocation6 [shape = 'u8[1024]{0}', space=vmem, size = 0x400, scoped, tag = 'input window, operand 1']
    #allocation7 [shape = 's32[2]{0}', space=sflag, size = 0x8, scoped, tag = 'scoped memory for tpu_custom_call.1']
    #allocation8 [shape = 'u8[16384]{0}', space=vmem, size = 0x4000, scoped, tag = 'input window, operand 2, single buffered']
    #allocation9 [shape = 'u8[8192]{0}', space=vmem, size = 0x2000, scoped, tag = 'output window, operand 0']
    %9 = vsyncpa [#allocation4], 0
    %s10 = scalar_lea.sflag [#allocation4], 1
    %11 = vsyncpa %s10, 0
    %12 = vsyncpa [#allocation7], 0
    %s13 = scalar_lea.sflag [#allocation7], 1
    %14 = vsyncpa %s13, 0
    %15 = vsyncpa [#allocation5], 0
    %s16 = scalar_lea.sflag [#allocation5], 1
    %17 = vsyncpa %s16, 0
    loop: start=0, step=1, limit=4
    $region2: #{tpu_custom_call.1} parent=1 // loop_pre_header
      _
    $region3: #{tpu_custom_call.1} parent=1 // loop_header
      %s19 = sphi 0, %s23
      %p20 = scmp.ge.s32.totalorder %s19, 4
      %s26 = sphi 0, %s45
      %s27 = sphi 0, %s41
      %s28 = sphi 0, %s37
      %s29 = sphi 0, %s26
      %s30 = sphi 0, %s27
      %s31 = sphi 0, %s28
      %s32 = sphi 0, %s29
      %s33 = sphi 0, %s30
      %s34 = sphi 0, %s31
      %s48 = sphi 0, %s50
      %s51 = sphi 0, %s48
      %s52 = sphi 0, %s51
      %s68 = sphi 0, %s52
      %s74 = sphi 0, %s76
      %s77 = sphi 0, %s74
      %s78 = sphi 0, %s77
      %s94 = sphi 0, %s78
      %s98 = sphi 0, %s98
      %s100 = sphi 0, %s98
      %s101 = sphi 0, %s100
      %s115 = sphi 0, %s101
      %s119 = sphi 0, %s119
      %s121 = sphi 0, %s119
      %s122 = sphi 0, %s121
      %s136 = sphi 0, %s122
      %s146 = sphi 0, %s148
      %s149 = sphi 0, %s146
      %s150 = sphi 0, %s149
      %s166 = sphi 0, %s150
    $region4: #{tpu_custom_call.1} parent=1 // loop_header_branch
      %22 = sbr.rel (%p20) target = $region8
    $region5: #{tpu_custom_call.1} parent=1 // loop_body
      %s24 = ssub.s32 %s19, 1
      %s25 = ssub.s32 %s19, 2
      %s35 = sadd.s32 1, %s28
      %p36 = scmp.ge.s32.totalorder %s35, 1
      %s37 = scalar_select %p36, 0, %s35
      %s38 = sadd.s32 1, %s27
      %s39 = scalar_select %p36, %s38, %s27
      %p40 = scmp.ge.s32.totalorder %s39, 1
      %s41 = scalar_select %p40, 0, %s39
      %s42 = sadd.s32 1, %s26
      %s43 = scalar_select %p40, %s42, %s26
      %p44 = scmp.ge.s32.totalorder %s43, 2
      %s45 = scalar_select %p44, 0, %s43
      %s46 = ssub.s32 %s26, %s45
      %p47 = scmp.eq.s32.totalorder %s46, 0
      %s49 = sadd.s32 %s48, 1
      %s50 = scalar_select %p47, %s48, %s49
      %p53 = pneg %p47
      %p54 = scmp.eq.s32.totalorder %s19, 1
      %p55 = por %p53, %p54
      %p56 = scmp.ne.s32.totalorder %s48, %s51
      %p57 = scmp.eq.s32.totalorder %s19, 0
      %p58 = por %p56, %p57
      %p59 = scmp.ne.s32.totalorder %s48, %s51
      %p60 = scmp.eq.s32.totalorder %s24, 1
      %p61 = por %p59, %p60
      %p62 = scmp.ne.s32.totalorder %s51, %s52
      %p63 = scmp.eq.s32.totalorder %s24, 0
      %p64 = por %p62, %p63
      %p65 = scmp.ne.s32.totalorder %s51, %s52
      %p66 = scmp.eq.s32.totalorder %s25, 1
      %p67 = por %p65, %p66
      %p69 = scmp.ne.s32.totalorder %s52, %s68
      %p70 = scmp.eq.s32.totalorder %s25, 0
      %p71 = por %p69, %p70
      %s72 = ssub.s32 %s26, %s45
      %p73 = scmp.eq.s32.totalorder %s72, 0
      %s75 = sadd.s32 %s74, 1
      %s76 = scalar_select %p73, %s74, %s75
      %p79 = pneg %p73
      %p80 = scmp.eq.s32.totalorder %s19, 1
      %p81 = por %p79, %p80
      %p82 = scmp.ne.s32.totalorder %s74, %s77
      %p83 = scmp.eq.s32.totalorder %s19, 0
      %p84 = por %p82, %p83
      %p85 = scmp.ne.s32.totalorder %s74, %s77
      %p86 = scmp.eq.s32.totalorder %s24, 1
      %p87 = por %p85, %p86
      %p88 = scmp.ne.s32.totalorder %s77, %s78
      %p89 = scmp.eq.s32.totalorder %s24, 0
      %p90 = por %p88, %p89
      %p91 = scmp.ne.s32.totalorder %s77, %s78
      %p92 = scmp.eq.s32.totalorder %s25, 1
      %p93 = por %p91, %p92
      %p95 = scmp.ne.s32.totalorder %s78, %s94
      %p96 = scmp.eq.s32.totalorder %s25, 0
      %p97 = por %p95, %p96
      %s99 = sadd.s32 %s98, 1
      %p102 = scmp.eq.s32.totalorder %s19, 1
      %p103 = scmp.ne.s32.totalorder %s98, %s100
      %p104 = scmp.eq.s32.totalorder %s19, 0
      %p105 = por %p103, %p104
      %p106 = scmp.ne.s32.totalorder %s98, %s100
      %p107 = scmp.eq.s32.totalorder %s24, 1
      %p108 = por %p106, %p107
      %p109 = scmp.ne.s32.totalorder %s100, %s101
      %p110 = scmp.eq.s32.totalorder %s24, 0
      %p111 = por %p109, %p110
      %p112 = scmp.ne.s32.totalorder %s100, %s101
      %p113 = scmp.eq.s32.totalorder %s25, 1
      %p114 = por %p112, %p113
      %p116 = scmp.ne.s32.totalorder %s101, %s115
      %p117 = scmp.eq.s32.totalorder %s25, 0
      %p118 = por %p116, %p117
      %s120 = sadd.s32 %s119, 1
      %p123 = scmp.eq.s32.totalorder %s19, 1
      %p124 = scmp.ne.s32.totalorder %s119, %s121
      %p125 = scmp.eq.s32.totalorder %s19, 0
      %p126 = por %p124, %p125
      %p127 = scmp.ne.s32.totalorder %s119, %s121
      %p128 = scmp.eq.s32.totalorder %s24, 1
      %p129 = por %p127, %p128
      %p130 = scmp.ne.s32.totalorder %s121, %s122
      %p131 = scmp.eq.s32.totalorder %s24, 0
      %p132 = por %p130, %p131
      %p133 = scmp.ne.s32.totalorder %s121, %s122
      %p134 = scmp.eq.s32.totalorder %s25, 1
      %p135 = por %p133, %p134
      %p137 = scmp.ne.s32.totalorder %s122, %s136
      %p138 = scmp.eq.s32.totalorder %s25, 0
      %p139 = por %p137, %p138
      %s140 = ssub.s32 %s26, %s45
      %s141 = ssub.s32 %s28, %s37
      %s142 = sor.u32 %s140, %s141
      %s143 = ssub.s32 %s27, %s41
      %s144 = sor.u32 %s142, %s143
      %p145 = scmp.eq.s32.totalorder %s144, 0
      %s147 = sadd.s32 %s146, 1
      %s148 = scalar_select %p145, %s146, %s147
      %p151 = pneg %p145
      %p152 = scmp.eq.s32.totalorder %s19, 1
      %p153 = por %p151, %p152
      %p154 = scmp.ne.s32.totalorder %s146, %s149
      %p155 = scmp.eq.s32.totalorder %s19, 0
      %p156 = por %p154, %p155
      %p157 = scmp.ne.s32.totalorder %s146, %s149
      %p158 = scmp.eq.s32.totalorder %s24, 1
      %p159 = por %p157, %p158
      %p160 = scmp.ne.s32.totalorder %s149, %s150
      %p161 = scmp.eq.s32.totalorder %s24, 0
      %p162 = por %p160, %p161
      %p163 = scmp.ne.s32.totalorder %s149, %s150
      %p164 = scmp.eq.s32.totalorder %s25, 1
      %p165 = por %p163, %p164
      %p167 = scmp.ne.s32.totalorder %s150, %s166
      %p168 = scmp.eq.s32.totalorder %s25, 0
      %p169 = por %p167, %p168
      %p170 = scmp.le.s32.totalorder 1, %s19
      %p171 = scmp.lt.s32.totalorder %s19, 3
      %p172 = pnand %p170, %p171
      %p173 = pneg %p172
      // Predicated region
      $region9: #{tpu_custom_call.1} parent=5 // pred_check
        _
      $region10: #{tpu_custom_call.1} parent=5 // pred_check_branch
        %175 = sbr.rel (%p172) target = $region12
      $region11: #{tpu_custom_call.1} parent=5 // pred_region
        %s176 = ssub.s32 %s19, 1
        // Predicated region
        $region13: #{tpu_custom_call.1} parent=11 // pred_check
          %p177 = pneg %p111
        $region14: #{tpu_custom_call.1} parent=11 // pred_check_branch
          %179 = sbr.rel (%p177) target = $region16
        $region15: #{tpu_custom_call.1} parent=11 // pred_region
          %181 = vsyncadd [#allocation7], 0
          %s182 = sshll.u32 %s2, 4
          %s183 = int_to_ptr.hbm [resolvable:$true] %s182
          %s184 = sshll.u32 [#allocation8], 4
          %s185 = int_to_ptr.vmem [resolvable:$true] %s184
          %190 = dma.hbm_to_vmem [thread:$0]  %s183, 512, %s185, [#allocation7], 128, 128, 8
        $region16: #{tpu_custom_call.1} parent=11 // pred_fallthru
          _
        // Predicated region
        $region17: #{tpu_custom_call.1} parent=11 // pred_check
          %p191 = pneg %p132
        $region18: #{tpu_custom_call.1} parent=11 // pred_check_branch
          %193 = sbr.rel (%p191) target = $region20
        $region19: #{tpu_custom_call.1} parent=11 // pred_region
          _
        $region20: #{tpu_custom_call.1} parent=11 // pred_fallthru
          _
      $region12: #{tpu_custom_call.1} parent=5 // pred_fallthru
        _
      %p194 = scmp.lt.s32.totalorder %s19, 2
      // Predicated region
      $region21: #{tpu_custom_call.1} parent=5 // pred_check
        %p195 = pneg %p194
      $region22: #{tpu_custom_call.1} parent=5 // pred_check_branch
        %197 = sbr.rel (%p195) target = $region24
      $region23: #{tpu_custom_call.1} parent=5 // pred_region
        // Predicated region
        $region25: #{tpu_custom_call.1} parent=23 // pred_check
          %p198 = pneg %p58
        $region26: #{tpu_custom_call.1} parent=23 // pred_check_branch
          %200 = sbr.rel (%p198) target = $region28
        $region27: #{tpu_custom_call.1} parent=23 // pred_region
          %s201 = sand.u32 %s48, 1
          %s202 = scalar_lea.sflag [#allocation4], %s201
          %s203 = sand.u32 %s48, 1
          %s204 = smul.addr %s203, 8
          %s205 = scalar_lea.vmem [#allocation3], %s204
          %207 = vsyncadd %s202, 0
          %s208 = smul.addr %s26, 8
          %s209 = scalar_lea.hbm %s0, %s208
          %s211 = sshll.u32 %s209, 4
          %s212 = int_to_ptr.hbm [resolvable:$true] %s211
          %s213 = sshll.u32 %s205, 4
          %s214 = int_to_ptr.vmem [resolvable:$true] %s213
          %216 = dma.hbm_to_vmem [thread:$0]  %s212, 128, %s214, %s202
        $region28: #{tpu_custom_call.1} parent=23 // pred_fallthru
          _
        // Predicated region
        $region29: #{tpu_custom_call.1} parent=23 // pred_check
          %p217 = pneg %p84
        $region30: #{tpu_custom_call.1} parent=23 // pred_check_branch
          %219 = sbr.rel (%p217) target = $region32
        $region31: #{tpu_custom_call.1} parent=23 // pred_region
          %s220 = sand.u32 %s19, 1
          %s221 = scalar_lea.sflag [#allocation7], %s220
          %s222 = sand.u32 %s74, 1
          %s223 = scalar_lea.vmem [#allocation6], %s222
          %225 = vsyncadd %s221, 0
          %s226 = scalar_lea.hbm %s1, %s26
          %s228 = sshll.u32 %s226, 4
          %s229 = int_to_ptr.hbm [resolvable:$true] %s228
          %s230 = sshll.u32 %s223, 4
          %s231 = int_to_ptr.vmem [resolvable:$true] %s230
          %233 = dma.hbm_to_vmem [thread:$0]  %s229, 16, %s231, %s221
        $region32: #{tpu_custom_call.1} parent=23 // pred_fallthru
          _
      $region24: #{tpu_custom_call.1} parent=5 // pred_fallthru
        _
      %p234 = scmp.le.s32.totalorder 1, %s19
      %p235 = scmp.lt.s32.totalorder %s19, 3
      %p236 = pnand %p234, %p235
      %p237 = pneg %p236
      // Predicated region
      $region33: #{tpu_custom_call.1} parent=5 // pred_check
        _
      $region34: #{tpu_custom_call.1} parent=5 // pred_check_branch
        %239 = sbr.rel (%p236) target = $region36
      $region35: #{tpu_custom_call.1} parent=5 // pred_region
        %s240 = ssub.s32 %s19, 1
        %s241 = sand.u32 %s51, 1
        %s242 = scalar_lea.sflag [#allocation4], %s241
        %s243 = sand.u32 %s51, 1
        %s244 = smul.addr %s243, 8
        %s245 = scalar_lea.vmem [#allocation3], %s244
        // Predicated region
        $region37: #{tpu_custom_call.1} parent=35 // pred_check
          %p246 = pneg %p64
        $region38: #{tpu_custom_call.1} parent=35 // pred_check_branch
          %248 = sbr.rel (%p246) target = $region40
        $region39: #{tpu_custom_call.1} parent=35 // pred_region
          %250 = dma.done %s242, 128
        $region40: #{tpu_custom_call.1} parent=35 // pred_fallthru
          _
        %s251 = sand.u32 %s24, 1
        %s252 = scalar_lea.sflag [#allocation7], %s251
        %s253 = sand.u32 %s77, 1
        %s254 = scalar_lea.vmem [#allocation6], %s253
        // Predicated region
        $region41: #{tpu_custom_call.1} parent=35 // pred_check
          %p255 = pneg %p90
        $region42: #{tpu_custom_call.1} parent=35 // pred_check_branch
          %257 = sbr.rel (%p255) target = $region44
        $region43: #{tpu_custom_call.1} parent=35 // pred_region
          %259 = dma.done %s252, 16
        $region44: #{tpu_custom_call.1} parent=35 // pred_fallthru
          _
        // Predicated region
        $region45: #{tpu_custom_call.1} parent=35 // pred_check
          %p260 = pneg %p111
        $region46: #{tpu_custom_call.1} parent=35 // pred_check_branch
          %262 = sbr.rel (%p260) target = $region48
        $region47: #{tpu_custom_call.1} parent=35 // pred_region
          %264 = dma.done [#allocation7], 512
        $region48: #{tpu_custom_call.1} parent=35 // pred_fallthru
          _
        %s265 = sand.u32 %s51, 1
        %s266 = scalar_lea.sflag [#allocation4], %s265
        %s267 = sand.u32 %s51, 1
        %s268 = smul.addr %s267, 8
        %s269 = scalar_lea.vmem [#allocation3], %s268
        %p270 = pneg %p64
        %p271 = pneg %p61
        %s272 = sand.u32 %s24, 1
        %s273 = scalar_lea.sflag [#allocation7], %s272
        %s274 = sand.u32 %s77, 1
        %s275 = scalar_lea.vmem [#allocation6], %s274
        %p276 = pneg %p90
        %p277 = pneg %p87
        %p278 = pneg %p111
        %p279 = pneg %p108
        %p280 = pneg %p132
        %p281 = pneg %p129
        %p282 = pneg %p162
        %p283 = pneg %p159
        %s284 = sand.u32 %s149, 1
        %s285 = scalar_lea.sflag [#allocation5], %s284
        %s286 = sand.u32 %s149, 1
        %s287 = smul.addr %s286, 8
        %s288 = scalar_lea.vmem [#allocation9], %s287
        %p289 = scmp.eq.s32.totalorder %s31, 0
        // Predicated region
        $region49: #{tpu_custom_call.1} parent=35 // pred_check
          %p290 = pneg %p289
        $region50: #{tpu_custom_call.1} parent=35 // pred_check_branch
          %292 = sbr.rel (%p290) target = $region52
        $region51: #{tpu_custom_call.1} parent=35 // pred_region
          %v293 = vld [vmem:[%s245] sm:$0xff]
          %s294 = smul.u32 %s30, 32
          %s295 = scalar_lea.vmem [#allocation8], %s294
          %v296 = vld [vmem:[%s295] sm:$0xff]
          %v297 = vld [vmem:[%s295 + $0x8] sm:$0xff]
          %v298 = vld [vmem:[%s295 + $0x10] sm:$0xff]
          %v299 = vld [vmem:[%s295 + $0x18] sm:$0xff]
          %s300 = scalar_lea.vmem %s3, %s30
          %v301 = vld [vmem:[%s300] sm:$0x1]
          %v303 = vperm.slane %v301, 0
          %308 = vrot.lane.b32.xlu0 %v296, 96
          %v309 = vpop.permute.xlu0 %308
          %310 = vrot.lane.b32.xlu0 %v297, 96
          %v311 = vpop.permute.xlu0 %310
          %312 = vrot.lane.b32.xlu0 %v298, 96
          %v313 = vpop.permute.xlu0 %312
          %314 = vrot.lane.b32.xlu0 %v299, 96
          %v315 = vpop.permute.xlu0 %314
          %320 = vrot.lane.b32.xlu0 %v303, 96
          %v321 = vpop.permute.xlu0 %320
          %vm323 = vcmask 261120
          %v325 = vsel %vm323, %v293, 0
          %327 = vmatpush.msra.mxu0 0.0
          %328 = vmatpush.msra.mxu0 0.0
          %329 = vmatpush.msra.mxu0 0.0
          %330 = vmatpush.msra.mxu0 0.0
          %331 = vmatpush.msra.mxu0 0.0
          %332 = vmatpush.msra.mxu0 0.0
          %333 = vmatpush.msra.mxu0 0.0
          %334 = vmatpush.msra.mxu0 0.0
          %335 = vmatpush.msra.mxu0 0.0
          %336 = vmatpush.msra.mxu0 0.0
          %337 = vmatpush.msra.mxu0 0.0
          %338 = vmatpush.msra.mxu0 0.0
          %339 = vmatpush.msra.mxu0 %v315
          %340 = vmatpush.msra.mxu0 %v313
          %341 = vmatpush.msra.mxu0 %v311
          %342 = vmatpush.msra.mxu0 %v309
          %343 = vmatmul.f32.gmra.mxu0 %v325
          %v344 = vpop.f32.mrf.mxu0
          %v345 = vadd.f32 %v321, %v344
          %346 = vdwg.mxu0
          %vm347 = vcmask 523264
          %348 = vst.msk [vmem:[#allocation2] sm:$0xff] %vm347, %v345
        $region52: #{tpu_custom_call.1} parent=35 // pred_fallthru
          _
        %s349 = smul.u32 %s31, 8
        %s350 = scalar_lea.vmem %s245, %s349 [#allocation3]
        %v351 = vld [vmem:[%s350] sm:$0xff]
        %s352 = smul.u32 %s30, 32
        %s353 = scalar_lea.vmem [#allocation8], %s352
        %v354 = vld [vmem:[%s353] sm:$0xff]
        %v355 = vld [vmem:[%s353 + $0x8] sm:$0xff]
        %v356 = vld [vmem:[%s353 + $0x10] sm:$0xff]
        %v357 = vld [vmem:[%s353 + $0x18] sm:$0xff]
        %s358 = scalar_lea.vmem %s3, %s30
        %v359 = vld [vmem:[%s358] sm:$0x1]
        %v361 = vperm.slane %v359, 0
        %vm363 = vcmask 261120
        %v365 = vsel %vm363, %v351, 0
        %367 = vmatpush.msra.mxu0 0.0
        %368 = vmatpush.msra.mxu0 0.0
        %369 = vmatpush.msra.mxu0 0.0
        %370 = vmatpush.msra.mxu0 0.0
        %371 = vmatpush.msra.mxu0 0.0
        %372 = vmatpush.msra.mxu0 0.0
        %373 = vmatpush.msra.mxu0 0.0
        %374 = vmatpush.msra.mxu0 0.0
        %375 = vmatpush.msra.mxu0 0.0
        %376 = vmatpush.msra.mxu0 0.0
        %377 = vmatpush.msra.mxu0 0.0
        %378 = vmatpush.msra.mxu0 0.0
        %379 = vmatpush.msra.mxu0 %v357
        %380 = vmatpush.msra.mxu0 %v356
        %381 = vmatpush.msra.mxu0 %v355
        %382 = vmatpush.msra.mxu0 %v354
        %383 = vmatmul.f32.gmra.mxu0 %v365
        %v384 = vpop.f32.mrf.mxu0
        %v385 = vadd.f32 %v361, %v384
        %386 = vdwg.mxu0
        %v387 = vmul.f32 %v385, 0.5
        %v388 = vld [vmem:[%s254] sm:$0x1]
        %v389 = vld [vmem:[#allocation2] sm:$0xff]
        %v391 = vperm.slane %v388, 0
        %394 = vrot.lane.b32.xlu0 %v389, 96
        %v395 = vpop.permute.xlu0 %394
        %vm396 = vcmask 31744
        %v398 = vsel %vm396, %v387, 0
        %v400 = vsel %vm396, %v395, 0
        %402 = vmatpush.xpose.msra.mxu0 0.0
        %403 = vmatpush.xpose.msra.mxu0 0.0
        %404 = vmatpush.xpose.msra.mxu0 0.0
        %405 = vmatpush.xpose.msra.mxu0 0.0
        %406 = vmatpush.xpose.msra.mxu0 0.0
        %407 = vmatpush.xpose.msra.mxu0 0.0
        %408 = vmatpush.xpose.msra.mxu0 0.0
        %409 = vmatpush.xpose.msra.mxu0 0.0
        %410 = vmatpush.xpose.msra.mxu0 0.0
        %411 = vmatpush.xpose.msra.mxu0 0.0
        %412 = vmatpush.xpose.msra.mxu0 0.0
        %413 = vmatpush.xpose.msra.mxu0 0.0
        %414 = vmatpush.xpose.msra.mxu0 0.0
        %415 = vmatpush.xpose.msra.mxu0 0.0
        %416 = vmatpush.xpose.msra.mxu0 0.0
        %417 = vmatpush.xpose.msra.mxu0 %v400
        %418 = vmatmul.f32.gmra.mxu0 %v398
        %v419 = vpop.f32.mrf.mxu0
        %v420 = vadd.f32 %v391, %v419
        %421 = vdwg.mxu0
        %vm422 = vcmask 64512
        %v423 = vsel %vm422, %v420, -inf
        %424 = vmax.xlane.f32.xlu0 %v423
        %v425 = vpop.xlane.xlu0 %424
        %v426 = vsub.f32 %v420, %v425
        %v427 = vmul.f32 %v426, 1.442695
        %v428 = vpow.pop %v427
        %v429 = vsel %vm422, %v428, 0.0
        %430 = vadd.xlane.f32.xlu0 %v429
        %v431 = vpop.xlane.xlu0 %430
        %v433 = vsel %vm422, %v428, 0
        %435 = vmatpush.msra.mxu0 0.0
        %436 = vmatpush.msra.mxu0 0.0
        %437 = vmatpush.msra.mxu0 0.0
        %438 = vmatpush.msra.mxu0 0.0
        %439 = vmatpush.msra.mxu0 0.0
        %440 = vmatpush.msra.mxu0 0.0
        %441 = vmatpush.msra.mxu0 0.0
        %442 = vmatpush.msra.mxu0 0.0
        %443 = vmatpush.msra.mxu0 0.0
        %444 = vmatpush.msra.mxu0 0.0
        %445 = vmatpush.msra.mxu0 0.0
        %446 = vmatpush.msra.mxu0 0.0
        %447 = vmatpush.msra.mxu0 0.0
        %448 = vmatpush.msra.mxu0 0.0
        %449 = vmatpush.msra.mxu0 0.0
        %450 = vmatpush.msra.mxu0 %v389
        %451 = vmatmul.f32.gmra.mxu0 %v433
        %v452 = vpop.f32.mrf.mxu0
        %v453 = vadd.f32 0.0, %v452
        %454 = vdwg.mxu0
        %v455 = vrcp.pop %v431
        %v456 = vmul.f32 %v453, %v455
        %457 = vst.msk [vmem:[%s288] sm:$0xff] %vm396, %v456
        %v458 = vld [vmem:[#allocation2] sm:$0xff]
        %459 = vrot.lane.b32.xlu0 %v387, 124
        %v460 = vpop.permute.xlu0 %459
        %462 = vrot.lane.b32.xlu0 %v458, 92
        %v463 = vpop.permute.xlu0 %462
        %v464 = vsel %vm396, %v460, 0
        %v466 = vsel %vm396, %v463, 0
        %468 = vmatpush.xpose.msra.mxu0 0.0
        %469 = vmatpush.xpose.msra.mxu0 0.0
        %470 = vmatpush.xpose.msra.mxu0 0.0
        %471 = vmatpush.xpose.msra.mxu0 0.0
        %472 = vmatpush.xpose.msra.mxu0 0.0
        %473 = vmatpush.xpose.msra.mxu0 0.0
        %474 = vmatpush.xpose.msra.mxu0 0.0
        %475 = vmatpush.xpose.msra.mxu0 0.0
        %476 = vmatpush.xpose.msra.mxu0 0.0
        %477 = vmatpush.xpose.msra.mxu0 0.0
        %478 = vmatpush.xpose.msra.mxu0 0.0
        %479 = vmatpush.xpose.msra.mxu0 0.0
        %480 = vmatpush.xpose.msra.mxu0 0.0
        %481 = vmatpush.xpose.msra.mxu0 0.0
        %482 = vmatpush.xpose.msra.mxu0 0.0
        %483 = vmatpush.xpose.msra.mxu0 %v466
        %484 = vmatmul.f32.gmra.mxu0 %v464
        %v485 = vpop.f32.mrf.mxu0
        %v486 = vadd.f32 %v391, %v485
        %487 = vdwg.mxu0
        %v488 = vsel %vm422, %v486, -inf
        %489 = vmax.xlane.f32.xlu0 %v488
        %v490 = vpop.xlane.xlu0 %489
        %v491 = vsub.f32 %v486, %v490
        %v492 = vmul.f32 %v491, 1.442695
        %v493 = vpow.pop %v492
        %v494 = vsel %vm422, %v493, 0.0
        %495 = vadd.xlane.f32.xlu0 %v494
        %v496 = vpop.xlane.xlu0 %495
        %497 = vrot.lane.b32.xlu0 %v458, 124
        %v498 = vpop.permute.xlu0 %497
        %v501 = vsel %vm422, %v493, 0
        %503 = vmatpush.msra.mxu0 0.0
        %504 = vmatpush.msra.mxu0 0.0
        %505 = vmatpush.msra.mxu0 0.0
        %506 = vmatpush.msra.mxu0 0.0
        %507 = vmatpush.msra.mxu0 0.0
        %508 = vmatpush.msra.mxu0 0.0
        %509 = vmatpush.msra.mxu0 0.0
        %510 = vmatpush.msra.mxu0 0.0
        %511 = vmatpush.msra.mxu0 0.0
        %512 = vmatpush.msra.mxu0 0.0
        %513 = vmatpush.msra.mxu0 0.0
        %514 = vmatpush.msra.mxu0 0.0
        %515 = vmatpush.msra.mxu0 0.0
        %516 = vmatpush.msra.mxu0 0.0
        %517 = vmatpush.msra.mxu0 0.0
        %518 = vmatpush.msra.mxu0 %v498
        %519 = vmatmul.f32.gmra.mxu0 %v501
        %v520 = vpop.f32.mrf.mxu0
        %v521 = vadd.f32 0.0, %v520
        %522 = vdwg.mxu0
        %v523 = vrcp.pop %v496
        %v524 = vmul.f32 %v521, %v523
        %526 = vrot.lane.b32.xlu0 %v524, 4
        %v527 = vpop.permute.xlu0 %526
        %vm529 = vcmask 64544
        %530 = vst.msk [vmem:[%s288] sm:$0xff] %vm529, %v527
        %v531 = vld [vmem:[#allocation2] sm:$0xff]
        %532 = vrot.lane.b32.xlu0 %v387, 120
        %v533 = vpop.permute.xlu0 %532
        %535 = vrot.lane.b32.xlu0 %v531, 88
        %v536 = vpop.permute.xlu0 %535
        %v537 = vsel %vm396, %v533, 0
        %v539 = vsel %vm396, %v536, 0
        %541 = vmatpush.xpose.msra.mxu0 0.0
        %542 = vmatpush.xpose.msra.mxu0 0.0
        %543 = vmatpush.xpose.msra.mxu0 0.0
        %544 = vmatpush.xpose.msra.mxu0 0.0
        %545 = vmatpush.xpose.msra.mxu0 0.0
        %546 = vmatpush.xpose.msra.mxu0 0.0
        %547 = vmatpush.xpose.msra.mxu0 0.0
        %548 = vmatpush.xpose.msra.mxu0 0.0
        %549 = vmatpush.xpose.msra.mxu0 0.0
        %550 = vmatpush.xpose.msra.mxu0 0.0
        %551 = vmatpush.xpose.msra.mxu0 0.0
        %552 = vmatpush.xpose.msra.mxu0 0.0
        %553 = vmatpush.xpose.msra.mxu0 0.0
        %554 = vmatpush.xpose.msra.mxu0 0.0
        %555 = vmatpush.xpose.msra.mxu0 0.0
        %556 = vmatpush.xpose.msra.mxu0 %v539
        %557 = vmatmul.f32.gmra.mxu0 %v537
        %v558 = vpop.f32.mrf.mxu0
        %v559 = vadd.f32 %v391, %v558
        %560 = vdwg.mxu0
        %v561 = vsel %vm422, %v559, -inf
        %562 = vmax.xlane.f32.xlu0 %v561
        %v563 = vpop.xlane.xlu0 %562
        %v564 = vsub.f32 %v559, %v563
        %v565 = vmul.f32 %v564, 1.442695
        %v566 = vpow.pop %v565
        %v567 = vsel %vm422, %v566, 0.0
        %568 = vadd.xlane.f32.xlu0 %v567
        %v569 = vpop.xlane.xlu0 %568
        %570 = vrot.lane.b32.xlu0 %v531, 120
        %v571 = vpop.permute.xlu0 %570
        %v574 = vsel %vm422, %v566, 0
        %576 = vmatpush.msra.mxu0 0.0
        %577 = vmatpush.msra.mxu0 0.0
        %578 = vmatpush.msra.mxu0 0.0
        %579 = vmatpush.msra.mxu0 0.0
        %580 = vmatpush.msra.mxu0 0.0
        %581 = vmatpush.msra.mxu0 0.0
        %582 = vmatpush.msra.mxu0 0.0
        %583 = vmatpush.msra.mxu0 0.0
        %584 = vmatpush.msra.mxu0 0.0
        %585 = vmatpush.msra.mxu0 0.0
        %586 = vmatpush.msra.mxu0 0.0
        %587 = vmatpush.msra.mxu0 0.0
        %588 = vmatpush.msra.mxu0 0.0
        %589 = vmatpush.msra.mxu0 0.0
        %590 = vmatpush.msra.mxu0 0.0
        %591 = vmatpush.msra.mxu0 %v571
        %592 = vmatmul.f32.gmra.mxu0 %v574
        %v593 = vpop.f32.mrf.mxu0
        %v594 = vadd.f32 0.0, %v593
        %595 = vdwg.mxu0
        %v596 = vrcp.pop %v569
        %v597 = vmul.f32 %v594, %v596
        %599 = vrot.lane.b32.xlu0 %v597, 8
        %v600 = vpop.permute.xlu0 %599
        %vm602 = vcmask 97344
        %603 = vst.msk [vmem:[%s288] sm:$0xff] %vm602, %v600
        %v604 = vld [vmem:[#allocation2] sm:$0xff]
        %605 = vrot.lane.b32.xlu0 %v387, 116
        %v606 = vpop.permute.xlu0 %605
        %608 = vrot.lane.b32.xlu0 %v604, 84
        %v609 = vpop.permute.xlu0 %608
        %v610 = vsel %vm396, %v606, 0
        %v612 = vsel %vm396, %v609, 0
        %614 = vmatpush.xpose.msra.mxu0 0.0
        %615 = vmatpush.xpose.msra.mxu0 0.0
        %616 = vmatpush.xpose.msra.mxu0 0.0
        %617 = vmatpush.xpose.msra.mxu0 0.0
        %618 = vmatpush.xpose.msra.mxu0 0.0
        %619 = vmatpush.xpose.msra.mxu0 0.0
        %620 = vmatpush.xpose.msra.mxu0 0.0
        %621 = vmatpush.xpose.msra.mxu0 0.0
        %622 = vmatpush.xpose.msra.mxu0 0.0
        %623 = vmatpush.xpose.msra.mxu0 0.0
        %624 = vmatpush.xpose.msra.mxu0 0.0
        %625 = vmatpush.xpose.msra.mxu0 0.0
        %626 = vmatpush.xpose.msra.mxu0 0.0
        %627 = vmatpush.xpose.msra.mxu0 0.0
        %628 = vmatpush.xpose.msra.mxu0 0.0
        %629 = vmatpush.xpose.msra.mxu0 %v612
        %630 = vmatmul.f32.gmra.mxu0 %v610
        %v631 = vpop.f32.mrf.mxu0
        %v632 = vadd.f32 %v391, %v631
        %633 = vdwg.mxu0
        %v634 = vsel %vm422, %v632, -inf
        %635 = vmax.xlane.f32.xlu0 %v634
        %v636 = vpop.xlane.xlu0 %635
        %v637 = vsub.f32 %v632, %v636
        %v638 = vmul.f32 %v637, 1.442695
        %v639 = vpow.pop %v638
        %v640 = vsel %vm422, %v639, 0.0
        %641 = vadd.xlane.f32.xlu0 %v640
        %v642 = vpop.xlane.xlu0 %641
        %643 = vrot.lane.b32.xlu0 %v604, 116
        %v644 = vpop.permute.xlu0 %643
        %v647 = vsel %vm422, %v639, 0
        %649 = vmatpush.msra.mxu0 0.0
        %650 = vmatpush.msra.mxu0 0.0
        %651 = vmatpush.msra.mxu0 0.0
        %652 = vmatpush.msra.mxu0 0.0
        %653 = vmatpush.msra.mxu0 0.0
        %654 = vmatpush.msra.mxu0 0.0
        %655 = vmatpush.msra.mxu0 0.0
        %656 = vmatpush.msra.mxu0 0.0
        %657 = vmatpush.msra.mxu0 0.0
        %658 = vmatpush.msra.mxu0 0.0
        %659 = vmatpush.msra.mxu0 0.0
        %660 = vmatpush.msra.mxu0 0.0
        %661 = vmatpush.msra.mxu0 0.0
        %662 = vmatpush.msra.mxu0 0.0
        %663 = vmatpush.msra.mxu0 0.0
        %664 = vmatpush.msra.mxu0 %v644
        %665 = vmatmul.f32.gmra.mxu0 %v647
        %v666 = vpop.f32.mrf.mxu0
        %v667 = vadd.f32 0.0, %v666
        %668 = vdwg.mxu0
        %v669 = vrcp.pop %v642
        %v670 = vmul.f32 %v667, %v669
        %672 = vrot.lane.b32.xlu0 %v670, 12
        %v673 = vpop.permute.xlu0 %672
        %vm675 = vcmask 130144
        %676 = vst.msk [vmem:[%s288] sm:$0xff] %vm675, %v673
        %v677 = vld [vmem:[#allocation2] sm:$0xff]
        %678 = vrot.lane.b32.xlu0 %v387, 112
        %v679 = vpop.permute.xlu0 %678
        %681 = vrot.lane.b32.xlu0 %v677, 80
        %v682 = vpop.permute.xlu0 %681
        %v683 = vsel %vm396, %v679, 0
        %v685 = vsel %vm396, %v682, 0
        %687 = vmatpush.xpose.msra.mxu0 0.0
        %688 = vmatpush.xpose.msra.mxu0 0.0
        %689 = vmatpush.xpose.msra.mxu0 0.0
        %690 = vmatpush.xpose.msra.mxu0 0.0
        %691 = vmatpush.xpose.msra.mxu0 0.0
        %692 = vmatpush.xpose.msra.mxu0 0.0
        %693 = vmatpush.xpose.msra.mxu0 0.0
        %694 = vmatpush.xpose.msra.mxu0 0.0
        %695 = vmatpush.xpose.msra.mxu0 0.0
        %696 = vmatpush.xpose.msra.mxu0 0.0
        %697 = vmatpush.xpose.msra.mxu0 0.0
        %698 = vmatpush.xpose.msra.mxu0 0.0
        %699 = vmatpush.xpose.msra.mxu0 0.0
        %700 = vmatpush.xpose.msra.mxu0 0.0
        %701 = vmatpush.xpose.msra.mxu0 0.0
        %702 = vmatpush.xpose.msra.mxu0 %v685
        %703 = vmatmul.f32.gmra.mxu0 %v683
        %v704 = vpop.f32.mrf.mxu0
        %v705 = vadd.f32 %v391, %v704
        %706 = vdwg.mxu0
        %v707 = vsel %vm422, %v705, -inf
        %708 = vmax.xlane.f32.xlu0 %v707
        %v709 = vpop.xlane.xlu0 %708
        %v710 = vsub.f32 %v705, %v709
        %v711 = vmul.f32 %v710, 1.442695
        %v712 = vpow.pop %v711
        %v713 = vsel %vm422, %v712, 0.0
        %714 = vadd.xlane.f32.xlu0 %v713
        %v715 = vpop.xlane.xlu0 %714
        %716 = vrot.lane.b32.xlu0 %v677, 112
        %v717 = vpop.permute.xlu0 %716
        %v720 = vsel %vm422, %v712, 0
        %722 = vmatpush.msra.mxu0 0.0
        %723 = vmatpush.msra.mxu0 0.0
        %724 = vmatpush.msra.mxu0 0.0
        %725 = vmatpush.msra.mxu0 0.0
        %726 = vmatpush.msra.mxu0 0.0
        %727 = vmatpush.msra.mxu0 0.0
        %728 = vmatpush.msra.mxu0 0.0
        %729 = vmatpush.msra.mxu0 0.0
        %730 = vmatpush.msra.mxu0 0.0
        %731 = vmatpush.msra.mxu0 0.0
        %732 = vmatpush.msra.mxu0 0.0
        %733 = vmatpush.msra.mxu0 0.0
        %734 = vmatpush.msra.mxu0 0.0
        %735 = vmatpush.msra.mxu0 0.0
        %736 = vmatpush.msra.mxu0 0.0
        %737 = vmatpush.msra.mxu0 %v717
        %738 = vmatmul.f32.gmra.mxu0 %v720
        %v739 = vpop.f32.mrf.mxu0
        %v740 = vadd.f32 0.0, %v739
        %741 = vdwg.mxu0
        %v742 = vrcp.pop %v715
        %v743 = vmul.f32 %v740, %v742
        %745 = vrot.lane.b32.xlu0 %v743, 16
        %v746 = vpop.permute.xlu0 %745
        %vm748 = vcmask 162944
        %749 = vst.msk [vmem:[%s288] sm:$0xff] %vm748, %v746
        %v750 = vld [vmem:[#allocation2] sm:$0xff]
        %751 = vrot.lane.b32.xlu0 %v387, 108
        %v752 = vpop.permute.xlu0 %751
        %754 = vrot.lane.b32.xlu0 %v750, 76
        %v755 = vpop.permute.xlu0 %754
        %v756 = vsel %vm396, %v752, 0
        %v758 = vsel %vm396, %v755, 0
        %760 = vmatpush.xpose.msra.mxu0 0.0
        %761 = vmatpush.xpose.msra.mxu0 0.0
        %762 = vmatpush.xpose.msra.mxu0 0.0
        %763 = vmatpush.xpose.msra.mxu0 0.0
        %764 = vmatpush.xpose.msra.mxu0 0.0
        %765 = vmatpush.xpose.msra.mxu0 0.0
        %766 = vmatpush.xpose.msra.mxu0 0.0
        %767 = vmatpush.xpose.msra.mxu0 0.0
        %768 = vmatpush.xpose.msra.mxu0 0.0
        %769 = vmatpush.xpose.msra.mxu0 0.0
        %770 = vmatpush.xpose.msra.mxu0 0.0
        %771 = vmatpush.xpose.msra.mxu0 0.0
        %772 = vmatpush.xpose.msra.mxu0 0.0
        %773 = vmatpush.xpose.msra.mxu0 0.0
        %774 = vmatpush.xpose.msra.mxu0 0.0
        %775 = vmatpush.xpose.msra.mxu0 %v758
        %776 = vmatmul.f32.gmra.mxu0 %v756
        %v777 = vpop.f32.mrf.mxu0
        %v778 = vadd.f32 %v391, %v777
        %779 = vdwg.mxu0
        %v780 = vsel %vm422, %v778, -inf
        %781 = vmax.xlane.f32.xlu0 %v780
        %v782 = vpop.xlane.xlu0 %781
        %v783 = vsub.f32 %v778, %v782
        %v784 = vmul.f32 %v783, 1.442695
        %v785 = vpow.pop %v784
        %v786 = vsel %vm422, %v785, 0.0
        %787 = vadd.xlane.f32.xlu0 %v786
        %v788 = vpop.xlane.xlu0 %787
        %789 = vrot.lane.b32.xlu0 %v750, 108
        %v790 = vpop.permute.xlu0 %789
        %v793 = vsel %vm422, %v785, 0
        %795 = vmatpush.msra.mxu0 0.0
        %796 = vmatpush.msra.mxu0 0.0
        %797 = vmatpush.msra.mxu0 0.0
        %798 = vmatpush.msra.mxu0 0.0
        %799 = vmatpush.msra.mxu0 0.0
        %800 = vmatpush.msra.mxu0 0.0
        %801 = vmatpush.msra.mxu0 0.0
        %802 = vmatpush.msra.mxu0 0.0
        %803 = vmatpush.msra.mxu0 0.0
        %804 = vmatpush.msra.mxu0 0.0
        %805 = vmatpush.msra.mxu0 0.0
        %806 = vmatpush.msra.mxu0 0.0
        %807 = vmatpush.msra.mxu0 0.0
        %808 = vmatpush.msra.mxu0 0.0
        %809 = vmatpush.msra.mxu0 0.0
        %810 = vmatpush.msra.mxu0 %v790
        %811 = vmatmul.f32.gmra.mxu0 %v793
        %v812 = vpop.f32.mrf.mxu0
        %v813 = vadd.f32 0.0, %v812
        %814 = vdwg.mxu0
        %v815 = vrcp.pop %v788
        %v816 = vmul.f32 %v813, %v815
        %818 = vrot.lane.b32.xlu0 %v816, 20
        %v819 = vpop.permute.xlu0 %818
        %vm821 = vcmask 195744
        %822 = vst.msk [vmem:[%s288] sm:$0xff] %vm821, %v819
        %v823 = vld [vmem:[#allocation2] sm:$0xff]
        %824 = vrot.lane.b32.xlu0 %v387, 104
        %v825 = vpop.permute.xlu0 %824
        %827 = vrot.lane.b32.xlu0 %v823, 72
        %v828 = vpop.permute.xlu0 %827
        %v829 = vsel %vm396, %v825, 0
        %v831 = vsel %vm396, %v828, 0
        %833 = vmatpush.xpose.msra.mxu0 0.0
        %834 = vmatpush.xpose.msra.mxu0 0.0
        %835 = vmatpush.xpose.msra.mxu0 0.0
        %836 = vmatpush.xpose.msra.mxu0 0.0
        %837 = vmatpush.xpose.msra.mxu0 0.0
        %838 = vmatpush.xpose.msra.mxu0 0.0
        %839 = vmatpush.xpose.msra.mxu0 0.0
        %840 = vmatpush.xpose.msra.mxu0 0.0
        %841 = vmatpush.xpose.msra.mxu0 0.0
        %842 = vmatpush.xpose.msra.mxu0 0.0
        %843 = vmatpush.xpose.msra.mxu0 0.0
        %844 = vmatpush.xpose.msra.mxu0 0.0
        %845 = vmatpush.xpose.msra.mxu0 0.0
        %846 = vmatpush.xpose.msra.mxu0 0.0
        %847 = vmatpush.xpose.msra.mxu0 0.0
        %848 = vmatpush.xpose.msra.mxu0 %v831
        %849 = vmatmul.f32.gmra.mxu0 %v829
        %v850 = vpop.f32.mrf.mxu0
        %v851 = vadd.f32 %v391, %v850
        %852 = vdwg.mxu0
        %v853 = vsel %vm422, %v851, -inf
        %854 = vmax.xlane.f32.xlu0 %v853
        %v855 = vpop.xlane.xlu0 %854
        %v856 = vsub.f32 %v851, %v855
        %v857 = vmul.f32 %v856, 1.442695
        %v858 = vpow.pop %v857
        %v859 = vsel %vm422, %v858, 0.0
        %860 = vadd.xlane.f32.xlu0 %v859
        %v861 = vpop.xlane.xlu0 %860
        %862 = vrot.lane.b32.xlu0 %v823, 104
        %v863 = vpop.permute.xlu0 %862
        %v866 = vsel %vm422, %v858, 0
        %868 = vmatpush.msra.mxu0 0.0
        %869 = vmatpush.msra.mxu0 0.0
        %870 = vmatpush.msra.mxu0 0.0
        %871 = vmatpush.msra.mxu0 0.0
        %872 = vmatpush.msra.mxu0 0.0
        %873 = vmatpush.msra.mxu0 0.0
        %874 = vmatpush.msra.mxu0 0.0
        %875 = vmatpush.msra.mxu0 0.0
        %876 = vmatpush.msra.mxu0 0.0
        %877 = vmatpush.msra.mxu0 0.0
        %878 = vmatpush.msra.mxu0 0.0
        %879 = vmatpush.msra.mxu0 0.0
        %880 = vmatpush.msra.mxu0 0.0
        %881 = vmatpush.msra.mxu0 0.0
        %882 = vmatpush.msra.mxu0 0.0
        %883 = vmatpush.msra.mxu0 %v863
        %884 = vmatmul.f32.gmra.mxu0 %v866
        %v885 = vpop.f32.mrf.mxu0
        %v886 = vadd.f32 0.0, %v885
        %887 = vdwg.mxu0
        %v888 = vrcp.pop %v861
        %v889 = vmul.f32 %v886, %v888
        %891 = vrot.lane.b32.xlu0 %v889, 24
        %v892 = vpop.permute.xlu0 %891
        %vm894 = vcmask 228544
        %895 = vst.msk [vmem:[%s288] sm:$0xff] %vm894, %v892
        %v896 = vld [vmem:[#allocation2] sm:$0xff]
        %897 = vrot.lane.b32.xlu0 %v387, 100
        %v898 = vpop.permute.xlu0 %897
        %900 = vrot.lane.b32.xlu0 %v896, 68
        %v901 = vpop.permute.xlu0 %900
        %v902 = vsel %vm396, %v898, 0
        %v904 = vsel %vm396, %v901, 0
        %906 = vmatpush.xpose.msra.mxu0 0.0
        %907 = vmatpush.xpose.msra.mxu0 0.0
        %908 = vmatpush.xpose.msra.mxu0 0.0
        %909 = vmatpush.xpose.msra.mxu0 0.0
        %910 = vmatpush.xpose.msra.mxu0 0.0
        %911 = vmatpush.xpose.msra.mxu0 0.0
        %912 = vmatpush.xpose.msra.mxu0 0.0
        %913 = vmatpush.xpose.msra.mxu0 0.0
        %914 = vmatpush.xpose.msra.mxu0 0.0
        %915 = vmatpush.xpose.msra.mxu0 0.0
        %916 = vmatpush.xpose.msra.mxu0 0.0
        %917 = vmatpush.xpose.msra.mxu0 0.0
        %918 = vmatpush.xpose.msra.mxu0 0.0
        %919 = vmatpush.xpose.msra.mxu0 0.0
        %920 = vmatpush.xpose.msra.mxu0 0.0
        %921 = vmatpush.xpose.msra.mxu0 %v904
        %922 = vmatmul.f32.gmra.mxu0 %v902
        %v923 = vpop.f32.mrf.mxu0
        %v924 = vadd.f32 %v391, %v923
        %925 = vdwg.mxu0
        %v926 = vsel %vm422, %v924, -inf
        %927 = vmax.xlane.f32.xlu0 %v926
        %v928 = vpop.xlane.xlu0 %927
        %v929 = vsub.f32 %v924, %v928
        %v930 = vmul.f32 %v929, 1.442695
        %v931 = vpow.pop %v930
        %v932 = vsel %vm422, %v931, 0.0
        %933 = vadd.xlane.f32.xlu0 %v932
        %v934 = vpop.xlane.xlu0 %933
        %935 = vrot.lane.b32.xlu0 %v896, 100
        %v936 = vpop.permute.xlu0 %935
        %v939 = vsel %vm422, %v931, 0
        %941 = vmatpush.msra.mxu0 0.0
        %942 = vmatpush.msra.mxu0 0.0
        %943 = vmatpush.msra.mxu0 0.0
        %944 = vmatpush.msra.mxu0 0.0
        %945 = vmatpush.msra.mxu0 0.0
        %946 = vmatpush.msra.mxu0 0.0
        %947 = vmatpush.msra.mxu0 0.0
        %948 = vmatpush.msra.mxu0 0.0
        %949 = vmatpush.msra.mxu0 0.0
        %950 = vmatpush.msra.mxu0 0.0
        %951 = vmatpush.msra.mxu0 0.0
        %952 = vmatpush.msra.mxu0 0.0
        %953 = vmatpush.msra.mxu0 0.0
        %954 = vmatpush.msra.mxu0 0.0
        %955 = vmatpush.msra.mxu0 0.0
        %956 = vmatpush.msra.mxu0 %v936
        %957 = vmatmul.f32.gmra.mxu0 %v939
        %v958 = vpop.f32.mrf.mxu0
        %v959 = vadd.f32 0.0, %v958
        %960 = vdwg.mxu0
        %v961 = vrcp.pop %v934
        %v962 = vmul.f32 %v959, %v961
        %964 = vrot.lane.b32.xlu0 %v962, 28
        %v965 = vpop.permute.xlu0 %964
        %vm967 = vcmask 261344
        %968 = vst.msk [vmem:[%s288] sm:$0xff] %vm967, %v965
        %s969 = sand.u32 %s149, 1
        %s970 = scalar_lea.sflag [#allocation5], %s969
        %s971 = sand.u32 %s149, 1
        %s972 = smul.addr %s971, 8
        %s973 = scalar_lea.vmem [#allocation9], %s972
        // Predicated region
        $region53: #{tpu_custom_call.1} parent=35 // pred_check
          %p974 = pneg %p159
        $region54: #{tpu_custom_call.1} parent=35 // pred_check_branch
          %976 = sbr.rel (%p974) target = $region56
        $region55: #{tpu_custom_call.1} parent=35 // pred_region
          %978 = vsyncadd %s970, 0
          %s979 = sadd.s32 %s30, %s31
          %s980 = sadd.s32 %s979, %s29
          %s981 = smul.addr %s980, 8
          %s982 = scalar_lea.hbm %s4, %s981
          %s984 = sshll.u32 %s973, 4
          %s985 = int_to_ptr.vmem [resolvable:$true] %s984
          %s986 = sshll.u32 %s982, 4
          %s987 = int_to_ptr.hbm [resolvable:$true] %s986
          %989 = dma.vmem_to_hbm [thread:$0]  %s985, 128, %s987, %s970
        $region56: #{tpu_custom_call.1} parent=35 // pred_fallthru
          _
      $region36: #{tpu_custom_call.1} parent=5 // pred_fallthru
        _
      %p990 = scmp.le.s32.totalorder 2, %s19
      // Predicated region
      $region57: #{tpu_custom_call.1} parent=5 // pred_check
        %p991 = pneg %p990
      $region58: #{tpu_custom_call.1} parent=5 // pred_check_branch
        %993 = sbr.rel (%p991) target = $region60
      $region59: #{tpu_custom_call.1} parent=5 // pred_region
        %s994 = ssub.s32 %s19, 2
        // Predicated region
        $region61: #{tpu_custom_call.1} parent=59 // pred_check
          %p995 = pneg %p165
        $region62: #{tpu_custom_call.1} parent=59 // pred_check_branch
          %997 = sbr.rel (%p995) target = $region64
        $region63: #{tpu_custom_call.1} parent=59 // pred_region
          %s998 = sand.u32 %s150, 1
          %s999 = scalar_lea.sflag [#allocation5], %s998
          %s1000 = sand.u32 %s150, 1
          %s1001 = smul.addr %s1000, 8
          %s1002 = scalar_lea.vmem [#allocation9], %s1001
          %1004 = dma.done %s999, 128
        $region64: #{tpu_custom_call.1} parent=59 // pred_fallthru
          _
      $region60: #{tpu_custom_call.1} parent=5 // pred_fallthru
        _
    $region6: #{tpu_custom_call.1} parent=1 // loop_footer
      %s23 = sadd.s32 1, %s19
    $region7: #{tpu_custom_call.1} parent=1 // loop_footer_branch
      %18 = sbr.rel target = $region3
    $region8: #{tpu_custom_call.1} parent=1 // loop_exit
      _
    %1005 = vsyncpa [#allocation4], 1
    %s1006 = scalar_lea.sflag [#allocation4], 1
    %1007 = vsyncpa %s1006, 1
    %1008 = vsyncpa [#allocation7], 1
    %s1009 = scalar_lea.sflag [#allocation7], 1
    %1010 = vsyncpa %s1009, 1
    %1011 = vsyncpa [#allocation5], 1
    %s1012 = scalar_lea.sflag [#allocation5], 1
    %1013 = vsyncpa %s1012, 1

</llo_original>
